<compile_context>
chip_gen: v7x
topology: tpu7x:2x2x1
jax: 0.10.0
libtpu: 0.0.40
codegen_flags: <defaults>
</compile_context>

<pallas_src>
import jax
import jax.numpy as jnp
from jax.experimental import pallas as pl
from jax.experimental.pallas import tpu as pltpu

EMBED = 768   # BERT hidden size used by the pooler / decoder


def _head_kernel(cls_ref, wp_ref, bp_ref, wd_ref, bd_ref, out_ref):
    """Fused BERT-pooler + dropout(eval) + decoder linear.

    cls_ref : [B, 768]        f32  CLS-token hidden state
    wp_ref  : [768, 768]      bf16 pooler weight (in x out)
    bp_ref  : [1, 768]        f32  pooler bias
    wd_ref  : [768, wf_pad]   bf16 decoder weight (in x out, lane-padded to 128)
    bd_ref  : [1, wf_pad]     f32  decoder bias (lane-padded)
    out_ref : [B, wf_pad]     f32  decoder output (lane-dense store)
    """
    cls = cls_ref[...].astype(jnp.bfloat16)                              # [B, 768]

    # BertPooler: tanh(Linear(768, 768)(cls)) with f32 accumulation.
    pooled = jnp.tanh(
        jnp.dot(cls, wp_ref[...], preferred_element_type=jnp.float32)
        + bp_ref[...]
    )                                                                    # [B, 768] f32

    # nn.Dropout(p=0.3): identity in eval mode (deterministic forward).
    # Decoder head: pooled @ wd + bd.
    y = jnp.dot(pooled.astype(jnp.bfloat16), wd_ref[...],
                preferred_element_type=jnp.float32) + bd_ref[...]        # [B, wf_pad]

    out_ref[...] = y.astype(out_ref.dtype)


def prepare_params(wp, bp, wd, bd):
    """One-time parameter preparation (hoisted out of the per-call path).

    wp : [768, 768]   pooler weight (in x out)     bp : [768]     pooler bias
    wd : [768, word_f] decoder weight (in x out)   bd : [word_f]  decoder bias
    Returns a tuple of device arrays ready to feed `text_encoder_tcn_forward`.
    Call this ONCE (e.g. at model load), not per forward.
    """
    E = wp.shape[0]
    assert E == EMBED
    word_f = wd.shape[1]
    wf_pad = max(128, pl.cdiv(word_f, 128) * 128)   # lane-dense output width

    wp_bf = wp.astype(jnp.bfloat16)
    wd_pad = jnp.zeros((E, wf_pad), jnp.bfloat16).at[:, :word_f].set(
        wd.astype(jnp.bfloat16))
    bp2 = bp.reshape(1, E).astype(jnp.float32)
    bd_pad = jnp.zeros((1, wf_pad), jnp.float32).at[0, :word_f].set(
        bd.astype(jnp.float32))

    return (wp_bf, bp2, wd_pad, bd_pad, word_f, wf_pad)


def text_encoder_tcn_forward(last_hidden_state, prepared):
    """Pallas implementation of TextEncoderTCN.forward's computed path.

    last_hidden_state : [B, S, 768] float32 (stand-in for the BERT encoder output)
    prepared          : output of prepare_params(wp, bp, wd, bd)
    returns (y, 0) with y : [B, word_f] float32
    """
    wp_bf, bp2, wd_pad, bd_pad, word_f, wf_pad = prepared
    B, S, E = last_hidden_state.shape
    assert E == EMBED

    # CLS token only — tiny [B, 768] slice; keeps the kernel's input DMA S-independent.
    cls = last_hidden_state[:, 0, :]

    flops = 2 * B * (E * E + E * wf_pad)
    bytes_accessed = (cls.size * 4 + wp_bf.size * 2 + bp2.size * 4
                      + wd_pad.size * 2 + bd_pad.size * 4 + B * wf_pad * 4)

    y_pad = pl.pallas_call(
        _head_kernel,
        out_shape=jax.ShapeDtypeStruct((B, wf_pad), jnp.float32),
        in_specs=[
            pl.BlockSpec((B, E), lambda: (0, 0)),        # cls
            pl.BlockSpec((E, E), lambda: (0, 0)),        # wp (bf16)
            pl.BlockSpec((1, E), lambda: (0, 0)),        # bp
            pl.BlockSpec((E, wf_pad), lambda: (0, 0)),   # wd (bf16, lane-padded)
            pl.BlockSpec((1, wf_pad), lambda: (0, 0)),   # bd (lane-padded)
        ],
        out_specs=pl.BlockSpec((B, wf_pad), lambda: (0, 0)),
        cost_estimate=pl.CostEstimate(
            flops=flops, transcendentals=B * E, bytes_accessed=bytes_accessed),
    )(cls, wp_bf, bp2, wd_pad, bd_pad)

    # Un-pad to word_f (tiny slice).
    y = y_pad[:, :word_f]
    return y, 0


if __name__ == "__main__":
    # Small, module-consistent shapes: batch=2, seq=8, bert hidden=768, word_f=32.
    B, S, word_f = 2, 8, 32

    key = jax.random.PRNGKey(0)
    k_hid, k_wp, k_bp, k_wd = jax.random.split(key, 4)

    # Synthetic "BERT last_hidden_state" (pretrained encoder not reproduced).
    last_hidden_state = jax.random.normal(k_hid, (B, S, EMBED), dtype=jnp.float32)

    # Pooler params (pretrained in BertModel) — deterministic synthetic init.
    wp = 0.02 * jax.random.normal(k_wp, (EMBED, EMBED), dtype=jnp.float32)
    bp = 0.02 * jax.random.normal(k_bp, (EMBED,), dtype=jnp.float32)

    # Decoder params per TextEncoderTCN.init_weights(): weight ~ N(0, 0.01), bias = 0.
    # Stored as [in, out] (transpose of PyTorch's [out, in]).
    wd = 0.01 * jax.random.normal(k_wd, (EMBED, word_f), dtype=jnp.float32)
    bd = jnp.zeros((word_f,), dtype=jnp.float32)

    # One-time weight preparation (cast + pad), then the forward pass.
    prepared = jax.tree_util.tree_map(jax.block_until_ready, prepare_params(wp, bp, wd, bd))

    y, zero = text_encoder_tcn_forward(last_hidden_state, prepared)
    y = jax.block_until_ready(y)

    # Reference in plain JAX using the same bf16 weight path (f32 accumulation).
    cls = last_hidden_state[:, 0, :]
    pooled_ref = jnp.tanh(
        jnp.dot(cls.astype(jnp.bfloat16), wp.astype(jnp.bfloat16),
                preferred_element_type=jnp.float32) + bp)
    ref = jnp.dot(pooled_ref.astype(jnp.bfloat16), wd.astype(jnp.bfloat16),
                  preferred_element_type=jnp.float32) + bd
    # Full-precision reference for a looser sanity bound.
    ref_f32 = jnp.tanh(cls @ wp + bp) @ wd + bd

    assert y.shape == (B, word_f)
    assert zero == 0
    assert jnp.allclose(y, ref, atol=2e-3, rtol=2e-2)
    assert jnp.allclose(y, ref_f32, atol=2e-2, rtol=5e-2)

    print("KERNEL_OK")
</pallas_src>

<mosaic_0001>
module attributes {stable_mosaic.version = 11 : i64} {
  func.func @_head_kernel(%arg0: memref<2x768xf32, #tpu.memory_space<vmem>>, %arg1: memref<768x768xbf16, #tpu.memory_space<vmem>>, %arg2: memref<1x768xf32, #tpu.memory_space<vmem>>, %arg3: memref<768x128xbf16, #tpu.memory_space<vmem>>, %arg4: memref<1x128xf32, #tpu.memory_space<vmem>>, %arg5: memref<2x128xf32, #tpu.memory_space<vmem>>) attributes {dimension_semantics = [], scalar_prefetch = 0 : i64, scratch_operands = 0 : i64, tpu.core_type = #tpu.core_type<tc>} {
    %c0 = arith.constant 0 : index
    %c0_0 = arith.constant 0 : index
    %0 = vector.load %arg0[%c0, %c0_0] : memref<2x768xf32, #tpu.memory_space<vmem>>, vector<2x768xf32>
    %1 = arith.truncf %0 : vector<2x768xf32> to vector<2x768xbf16>
    %c0_1 = arith.constant 0 : index
    %c0_2 = arith.constant 0 : index
    %2 = vector.load %arg1[%c0_1, %c0_2] : memref<768x768xbf16, #tpu.memory_space<vmem>>, vector<768x768xbf16>
    %cst = arith.constant dense<0.000000e+00> : vector<2x768xf32>
    %3 = tpu.matmul %1, %2, %cst {dimension_numbers = #tpu.dot_dimension_numbers<[1], [0], [0], [1], [0, 0, 1, 1], [], []>} : vector<2x768xbf16>, vector<768x768xbf16>, vector<2x768xf32> -> vector<2x768xf32>
    %c0_3 = arith.constant 0 : index
    %c0_4 = arith.constant 0 : index
    %4 = vector.load %arg2[%c0_3, %c0_4] : memref<1x768xf32, #tpu.memory_space<vmem>>, vector<1x768xf32>
    %5 = vector.broadcast %4 : vector<1x768xf32> to vector<2x768xf32>
    %6 = arith.addf %3, %5 : vector<2x768xf32>
    %7 = math.tanh %6 : vector<2x768xf32>
    %8 = arith.truncf %7 : vector<2x768xf32> to vector<2x768xbf16>
    %c0_5 = arith.constant 0 : index
    %c0_6 = arith.constant 0 : index
    %9 = vector.load %arg3[%c0_5, %c0_6] : memref<768x128xbf16, #tpu.memory_space<vmem>>, vector<768x128xbf16>
    %cst_7 = arith.constant dense<0.000000e+00> : vector<2x128xf32>
    %10 = tpu.matmul %8, %9, %cst_7 {dimension_numbers = #tpu.dot_dimension_numbers<[1], [0], [0], [1], [0, 0, 1, 1], [], []>} : vector<2x768xbf16>, vector<768x128xbf16>, vector<2x128xf32> -> vector<2x128xf32>
    %c0_8 = arith.constant 0 : index
    %c0_9 = arith.constant 0 : index
    %11 = vector.load %arg4[%c0_8, %c0_9] : memref<1x128xf32, #tpu.memory_space<vmem>>, vector<1x128xf32>
    %12 = vector.broadcast %11 : vector<1x128xf32> to vector<2x128xf32>
    %13 = arith.addf %10, %12 : vector<2x128xf32>
    %c0_10 = arith.constant 0 : index
    %c0_11 = arith.constant 0 : index
    %14 = vector.load %arg5[%c0_10, %c0_11] : memref<2x128xf32, #tpu.memory_space<vmem>>, vector<2x128xf32>
    tpu.vector_store %arg5[%c0_10, %c0_11], %13 {strides = array<i32>} : memref<2x128xf32, #tpu.memory_space<vmem>>, vector<2x128xf32>,
    return
  }
}

</mosaic_0001>

<llo_original>
// kernel: tpu_custom_call.1
$region0: #{tpu_custom_call.1}
  #allocation0 [shape = 'u32[]', space=smem, size = 0x4, offset = 0x4, fixed_abs, tag = 'smem constant byte address 0x4 - core index']
  #allocation1 [shape = 'u32[144,128]{1,0:T(1,128)}', space=vmem, size = 0x12000, scoped, tag = 'internal scratch']
  %s0 = inlined_call_operand.hbm [shape: f32[2,768], index: 0, kind: input, shape index: {}]
  %s1 = inlined_call_operand.hbm [shape: bf16[768,768], index: 1, kind: input, shape index: {}]
  %s2 = inlined_call_operand.hbm [shape: f32[1,768], index: 2, kind: input, shape index: {}]
  %s3 = inlined_call_operand.hbm [shape: bf16[768,128], index: 3, kind: input, shape index: {}]
  %s4 = inlined_call_operand.hbm [shape: f32[1,128], index: 4, kind: input, shape index: {}]
  %s5 = inlined_call_operand.hbm [shape: f32[2,128], index: 5, kind: output, shape index: {}]
  %s6 = sld [smem:[#allocation0]]
  $region50: #{tpu_custom_call.1} parent=0
    _
  %s8 = ssub.s32 1, %s6
  %s9 = scalar_select 0, %s8, %s6
  $region1: #{tpu_custom_call.1} parent=0
    #allocation2 [shape = 'u8[6144]{0}', space=vmem, size = 0x1800, scoped, tag = 'input window, operand 0, single buffered']
    #allocation3 [shape = 's32[1]{0}', space=sflag, size = 0x4, scoped, tag = 'scoped memory for tpu_custom_call.1']
    #allocation4 [shape = 's32[1]{0}', space=sflag, size = 0x4, scoped, tag = 'scoped memory for tpu_custom_call.1']
    #allocation5 [shape = 'u8[1179648]{0}', space=vmem, size = 0x120000, scoped, tag = 'input window, operand 1, single buffered']
    #allocation6 [shape = 's32[1]{0}', space=sflag, size = 0x4, scoped, tag = 'scoped memory for tpu_custom_call.1']
    #allocation7 [shape = 'u8[3072]{0}', space=vmem, size = 0xc00, scoped, tag = 'input window, operand 2, single buffered']
    #allocation8 [shape = 'u8[196608]{0}', space=vmem, size = 0x30000, scoped, tag = 'input window, operand 3, single buffered']
    #allocation9 [shape = 's32[1]{0}', space=sflag, size = 0x4, scoped, tag = 'scoped memory for tpu_custom_call.1']
    #allocation10 [shape = 'u8[512]{0}', space=vmem, size = 0x400, scoped, tag = 'input window, operand 4, single buffered']
    #allocation11 [shape = 'u8[1024]{0}', space=vmem, size = 0x400, scoped, tag = 'output window, operand 0, single buffered']
    %10 = vsyncpa [#allocation3], 0
    %11 = vsyncpa [#allocation6], 0
    %12 = vsyncpa [#allocation9], 0
    %13 = vsyncpa [#allocation4], 0
    // Predicated region
    $region2: #{tpu_custom_call.1} parent=1 // pred_check
      _
    $region3: #{tpu_custom_call.1} parent=1 // pred_check_branch
      %15 = sbr.rel (0) target = $region5
    $region4: #{tpu_custom_call.1} parent=1 // pred_region
      %s17 = ssub.s32 192, 192
      %18 = vsyncadd [#allocation3], %s17
      %s20 = sshll.u32 [#allocation2], 4
      %s21 = int_to_ptr.vmem [resolvable:$true] %s20
      %23 = dma.hbm_to_vmem [thread:$0]  %s0, 192, %s21, [#allocation3]
    $region5: #{tpu_custom_call.1} parent=1 // pred_fallthru
      _
    // Predicated region
    $region6: #{tpu_custom_call.1} parent=1 // pred_check
      _
    $region7: #{tpu_custom_call.1} parent=1 // pred_check_branch
      %25 = sbr.rel (0) target = $region9
    $region8: #{tpu_custom_call.1} parent=1 // pred_region
      %s27 = ssub.s32 36864, 36864
      %28 = vsyncadd [#allocation6], %s27
      %s29 = sshll.u32 [#allocation5], 4
      %s30 = int_to_ptr.vmem [resolvable:$true] %s29
      %35 = dma.hbm_to_vmem [thread:$0]  %s1, 36864, %s30, [#allocation6], 384, 384, 24
    $region9: #{tpu_custom_call.1} parent=1 // pred_fallthru
      _
    // Predicated region
    $region10: #{tpu_custom_call.1} parent=1 // pred_check
      _
    $region11: #{tpu_custom_call.1} parent=1 // pred_check_branch
      %37 = sbr.rel (0) target = $region13
    $region12: #{tpu_custom_call.1} parent=1 // pred_region
      %s39 = ssub.s32 96, 96
      %40 = vsyncadd [#allocation6], %s39
      %s42 = sshll.u32 [#allocation7], 4
      %s43 = int_to_ptr.vmem [resolvable:$true] %s42
      %45 = dma.hbm_to_vmem [thread:$0]  %s2, 96, %s43, [#allocation6]
    $region13: #{tpu_custom_call.1} parent=1 // pred_fallthru
      _
    // Predicated region
    $region14: #{tpu_custom_call.1} parent=1 // pred_check
      _
    $region15: #{tpu_custom_call.1} parent=1 // pred_check_branch
      %47 = sbr.rel (0) target = $region17
    $region16: #{tpu_custom_call.1} parent=1 // pred_region
      %s49 = ssub.s32 6144, 6144
      %50 = vsyncadd [#allocation9], %s49
      %s51 = sshll.u32 [#allocation8], 4
      %s52 = int_to_ptr.vmem [resolvable:$true] %s51
      %57 = dma.hbm_to_vmem [thread:$0]  %s3, 6144, %s52, [#allocation9], 64, 64, 4
    $region17: #{tpu_custom_call.1} parent=1 // pred_fallthru
      _
    // Predicated region
    $region18: #{tpu_custom_call.1} parent=1 // pred_check
      _
    $region19: #{tpu_custom_call.1} parent=1 // pred_check_branch
      %59 = sbr.rel (0) target = $region21
    $region20: #{tpu_custom_call.1} parent=1 // pred_region
      %s61 = ssub.s32 16, 16
      %62 = vsyncadd [#allocation9], %s61
      %s64 = sshll.u32 [#allocation10], 4
      %s65 = int_to_ptr.vmem [resolvable:$true] %s64
      %67 = dma.hbm_to_vmem [thread:$0]  %s4, 16, %s65, [#allocation9]
    $region21: #{tpu_custom_call.1} parent=1 // pred_fallthru
      _
    // Predicated region
    $region22: #{tpu_custom_call.1} parent=1 // pred_check
      _
    $region23: #{tpu_custom_call.1} parent=1 // pred_check_branch
      %69 = sbr.rel (0) target = $region25
    $region24: #{tpu_custom_call.1} parent=1 // pred_region
      %70 = dma.done [#allocation3], 192
    $region25: #{tpu_custom_call.1} parent=1 // pred_fallthru
      _
    // Predicated region
    $region26: #{tpu_custom_call.1} parent=1 // pred_check
      _
    $region27: #{tpu_custom_call.1} parent=1 // pred_check_branch
      %72 = sbr.rel (0) target = $region29
    $region28: #{tpu_custom_call.1} parent=1 // pred_region
      %73 = dma.done [#allocation6], 36864
    $region29: #{tpu_custom_call.1} parent=1 // pred_fallthru
      _
    // Predicated region
    $region30: #{tpu_custom_call.1} parent=1 // pred_check
      _
    $region31: #{tpu_custom_call.1} parent=1 // pred_check_branch
      %75 = sbr.rel (0) target = $region33
    $region32: #{tpu_custom_call.1} parent=1 // pred_region
      %76 = dma.done [#allocation6], 96
    $region33: #{tpu_custom_call.1} parent=1 // pred_fallthru
      _
    // Predicated region
    $region34: #{tpu_custom_call.1} parent=1 // pred_check
      _
    $region35: #{tpu_custom_call.1} parent=1 // pred_check_branch
      %78 = sbr.rel (0) target = $region37
    $region36: #{tpu_custom_call.1} parent=1 // pred_region
      %79 = dma.done [#allocation9], 6144
    $region37: #{tpu_custom_call.1} parent=1 // pred_fallthru
      _
    // Predicated region
    $region38: #{tpu_custom_call.1} parent=1 // pred_check
      _
    $region39: #{tpu_custom_call.1} parent=1 // pred_check_branch
      %81 = sbr.rel (0) target = $region41
    $region40: #{tpu_custom_call.1} parent=1 // pred_region
      %82 = dma.done [#allocation9], 16
    $region41: #{tpu_custom_call.1} parent=1 // pred_fallthru
      _
    %v84 = vld [vmem:[#allocation2] sm:$0xff]
    %v85 = vld [vmem:[#allocation2 + $0x8] sm:$0xf]
    %v88 = vcombine.high %v84, %v84
    %v90 = vunpack.c.l.s4 1983009808
    %v91 = vunpack.c.0.s8 %v90
    %v92 = vlaneseq
    %v93 = vshrl.u32 %v92, 7
    %v94 = vsub.s32 %v91, %v93
    %v95 = vrot.slane %v84, %v94
    %v97 = vunpack.c.l.s4 1983009808
    %v98 = vunpack.c.0.s8 %v97
    %v99 = vlaneseq
    %v100 = vshrl.u32 %v99, 7
    %v101 = vsub.s32 %v98, %v100
    %v102 = vrot.slane %v88, %v101
    %v103 = vcombine.high %v95, %v95
    %v104 = vcombine.high %v102, %v102
    %v106 = vunpack.c.l.s4 1983009808
    %v107 = vunpack.c.0.s8 %v106
    %v108 = vlaneseq
    %v109 = vshrl.u32 %v108, 7
    %v110 = vsub.s32 %v107, %v109
    %v111 = vrot.slane %v85, %v110
    %v112 = vcombine.high %v111, %v111
    %v119 = vpack.c.bf16 %v95, %v95
    %v120 = vpack.c.bf16 %v103, %v103
    %v121 = vpack.c.bf16 %v102, %v102
    %v122 = vpack.c.bf16 %v104, %v104
    %v123 = vpack.c.bf16 %v111, %v111
    %v124 = vpack.c.bf16 %v112, %v112
    %v125 = vld [vmem:[#allocation5] sm:$0xff]
    %v126 = vld [vmem:[#allocation5 + $0x8] sm:$0xff]
    %v127 = vld [vmem:[#allocation5 + $0x10] sm:$0xff]
    %v128 = vld [vmem:[#allocation5 + $0x18] sm:$0xff]
    %v129 = vld [vmem:[#allocation5 + $0x20] sm:$0xff]
    %v130 = vld [vmem:[#allocation5 + $0x28] sm:$0xff]
    %v131 = vld [vmem:[#allocation5 + $0x30] sm:$0xff]
    %v132 = vld [vmem:[#allocation5 + $0x38] sm:$0xff]
    %v133 = vld [vmem:[#allocation5 + $0x40] sm:$0xff]
    %v134 = vld [vmem:[#allocation5 + $0x48] sm:$0xff]
    %v135 = vld [vmem:[#allocation5 + $0x50] sm:$0xff]
    %v136 = vld [vmem:[#allocation5 + $0x58] sm:$0xff]
    %v137 = vld [vmem:[#allocation5 + $0x60] sm:$0xff]
    %v138 = vld [vmem:[#allocation5 + $0x68] sm:$0xff]
    %v139 = vld [vmem:[#allocation5 + $0x70] sm:$0xff]
    %v140 = vld [vmem:[#allocation5 + $0x78] sm:$0xff]
    %v141 = vld [vmem:[#allocation5 + $0x80] sm:$0xff]
    %v142 = vld [vmem:[#allocation5 + $0x88] sm:$0xff]
    %v143 = vld [vmem:[#allocation5 + $0x90] sm:$0xff]
    %v144 = vld [vmem:[#allocation5 + $0x98] sm:$0xff]
    %v145 = vld [vmem:[#allocation5 + $0xa0] sm:$0xff]
    %v146 = vld [vmem:[#allocation5 + $0xa8] sm:$0xff]
    %v147 = vld [vmem:[#allocation5 + $0xb0] sm:$0xff]
    %v148 = vld [vmem:[#allocation5 + $0xb8] sm:$0xff]
    %v149 = vld [vmem:[#allocation5 + $0xc0] sm:$0xff]
    %v150 = vld [vmem:[#allocation5 + $0xc8] sm:$0xff]
    %v151 = vld [vmem:[#allocation5 + $0xd0] sm:$0xff]
    %v152 = vld [vmem:[#allocation5 + $0xd8] sm:$0xff]
    %v153 = vld [vmem:[#allocation5 + $0xe0] sm:$0xff]
    %v154 = vld [vmem:[#allocation5 + $0xe8] sm:$0xff]
    %v155 = vld [vmem:[#allocation5 + $0xf0] sm:$0xff]
    %v156 = vld [vmem:[#allocation5 + $0xf8] sm:$0xff]
    %v157 = vld [vmem:[#allocation5 + $0x100] sm:$0xff]
    %v158 = vld [vmem:[#allocation5 + $0x108] sm:$0xff]
    %v159 = vld [vmem:[#allocation5 + $0x110] sm:$0xff]
    %v160 = vld [vmem:[#allocation5 + $0x118] sm:$0xff]
    %v161 = vld [vmem:[#allocation5 + $0x120] sm:$0xff]
    %v162 = vld [vmem:[#allocation5 + $0x128] sm:$0xff]
    %v163 = vld [vmem:[#allocation5 + $0x130] sm:$0xff]
    %v164 = vld [vmem:[#allocation5 + $0x138] sm:$0xff]
    %v165 = vld [vmem:[#allocation5 + $0x140] sm:$0xff]
    %v166 = vld [vmem:[#allocation5 + $0x148] sm:$0xff]
    %v167 = vld [vmem:[#allocation5 + $0x150] sm:$0xff]
    %v168 = vld [vmem:[#allocation5 + $0x158] sm:$0xff]
    %v169 = vld [vmem:[#allocation5 + $0x160] sm:$0xff]
    %v170 = vld [vmem:[#allocation5 + $0x168] sm:$0xff]
    %v171 = vld [vmem:[#allocation5 + $0x170] sm:$0xff]
    %v172 = vld [vmem:[#allocation5 + $0x178] sm:$0xff]
    %v173 = vld [vmem:[#allocation5 + $0x180] sm:$0xff]
    %v174 = vld [vmem:[#allocation5 + $0x188] sm:$0xff]
    %v175 = vld [vmem:[#allocation5 + $0x190] sm:$0xff]
    %v176 = vld [vmem:[#allocation5 + $0x198] sm:$0xff]
    %v177 = vld [vmem:[#allocation5 + $0x1a0] sm:$0xff]
    %v178 = vld [vmem:[#allocation5 + $0x1a8] sm:$0xff]
    %v179 = vld [vmem:[#allocation5 + $0x1b0] sm:$0xff]
    %v180 = vld [vmem:[#allocation5 + $0x1b8] sm:$0xff]
    %v181 = vld [vmem:[#allocation5 + $0x1c0] sm:$0xff]
    %v182 = vld [vmem:[#allocation5 + $0x1c8] sm:$0xff]
    %v183 = vld [vmem:[#allocation5 + $0x1d0] sm:$0xff]
    %v184 = vld [vmem:[#allocation5 + $0x1d8] sm:$0xff]
    %v185 = vld [vmem:[#allocation5 + $0x1e0] sm:$0xff]
    %v186 = vld [vmem:[#allocation5 + $0x1e8] sm:$0xff]
    %v187 = vld [vmem:[#allocation5 + $0x1f0] sm:$0xff]
    %v188 = vld [vmem:[#allocation5 + $0x1f8] sm:$0xff]
    %v189 = vld [vmem:[#allocation5 + $0x200] sm:$0xff]
    %v190 = vld [vmem:[#allocation5 + $0x208] sm:$0xff]
    %v191 = vld [vmem:[#allocation5 + $0x210] sm:$0xff]
    %v192 = vld [vmem:[#allocation5 + $0x218] sm:$0xff]
    %v193 = vld [vmem:[#allocation5 + $0x220] sm:$0xff]
    %v194 = vld [vmem:[#allocation5 + $0x228] sm:$0xff]
    %v195 = vld [vmem:[#allocation5 + $0x230] sm:$0xff]
    %v196 = vld [vmem:[#allocation5 + $0x238] sm:$0xff]
    %v197 = vld [vmem:[#allocation5 + $0x240] sm:$0xff]
    %v198 = vld [vmem:[#allocation5 + $0x248] sm:$0xff]
    %v199 = vld [vmem:[#allocation5 + $0x250] sm:$0xff]
    %v200 = vld [vmem:[#allocation5 + $0x258] sm:$0xff]
    %v201 = vld [vmem:[#allocation5 + $0x260] sm:$0xff]
    %v202 = vld [vmem:[#allocation5 + $0x268] sm:$0xff]
    %v203 = vld [vmem:[#allocation5 + $0x270] sm:$0xff]
    %v204 = vld [vmem:[#allocation5 + $0x278] sm:$0xff]
    %v205 = vld [vmem:[#allocation5 + $0x280] sm:$0xff]
    %v206 = vld [vmem:[#allocation5 + $0x288] sm:$0xff]
    %v207 = vld [vmem:[#allocation5 + $0x290] sm:$0xff]
    %v208 = vld [vmem:[#allocation5 + $0x298] sm:$0xff]
    %v209 = vld [vmem:[#allocation5 + $0x2a0] sm:$0xff]
    %v210 = vld [vmem:[#allocation5 + $0x2a8] sm:$0xff]
    %v211 = vld [vmem:[#allocation5 + $0x2b0] sm:$0xff]
    %v212 = vld [vmem:[#allocation5 + $0x2b8] sm:$0xff]
    %v213 = vld [vmem:[#allocation5 + $0x2c0] sm:$0xff]
    %v214 = vld [vmem:[#allocation5 + $0x2c8] sm:$0xff]
    %v215 = vld [vmem:[#allocation5 + $0x2d0] sm:$0xff]
    %v216 = vld [vmem:[#allocation5 + $0x2d8] sm:$0xff]
    %v217 = vld [vmem:[#allocation5 + $0x2e0] sm:$0xff]
    %v218 = vld [vmem:[#allocation5 + $0x2e8] sm:$0xff]
    %v219 = vld [vmem:[#allocation5 + $0x2f0] sm:$0xff]
    %v220 = vld [vmem:[#allocation5 + $0x2f8] sm:$0xff]
    %v221 = vld [vmem:[#allocation5 + $0x300] sm:$0xff]
    %v222 = vld [vmem:[#allocation5 + $0x308] sm:$0xff]
    %v223 = vld [vmem:[#allocation5 + $0x310] sm:$0xff]
    %v224 = vld [vmem:[#allocation5 + $0x318] sm:$0xff]
    %v225 = vld [vmem:[#allocation5 + $0x320] sm:$0xff]
    %v226 = vld [vmem:[#allocation5 + $0x328] sm:$0xff]
    %v227 = vld [vmem:[#allocation5 + $0x330] sm:$0xff]
    %v228 = vld [vmem:[#allocation5 + $0x338] sm:$0xff]
    %v229 = vld [vmem:[#allocation5 + $0x340] sm:$0xff]
    %v230 = vld [vmem:[#allocation5 + $0x348] sm:$0xff]
    %v231 = vld [vmem:[#allocation5 + $0x350] sm:$0xff]
    %v232 = vld [vmem:[#allocation5 + $0x358] sm:$0xff]
    %v233 = vld [vmem:[#allocation5 + $0x360] sm:$0xff]
    %v234 = vld [vmem:[#allocation5 + $0x368] sm:$0xff]
    %v235 = vld [vmem:[#allocation5 + $0x370] sm:$0xff]
    %v236 = vld [vmem:[#allocation5 + $0x378] sm:$0xff]
    %v237 = vld [vmem:[#allocation5 + $0x380] sm:$0xff]
    %v238 = vld [vmem:[#allocation5 + $0x388] sm:$0xff]
    %v239 = vld [vmem:[#allocation5 + $0x390] sm:$0xff]
    %v240 = vld [vmem:[#allocation5 + $0x398] sm:$0xff]
    %v241 = vld [vmem:[#allocation5 + $0x3a0] sm:$0xff]
    %v242 = vld [vmem:[#allocation5 + $0x3a8] sm:$0xff]
    %v243 = vld [vmem:[#allocation5 + $0x3b0] sm:$0xff]
    %v244 = vld [vmem:[#allocation5 + $0x3b8] sm:$0xff]
    %v245 = vld [vmem:[#allocation5 + $0x3c0] sm:$0xff]
    %v246 = vld [vmem:[#allocation5 + $0x3c8] sm:$0xff]
    %v247 = vld [vmem:[#allocation5 + $0x3d0] sm:$0xff]
    %v248 = vld [vmem:[#allocation5 + $0x3d8] sm:$0xff]
    %v249 = vld [vmem:[#allocation5 + $0x3e0] sm:$0xff]
    %v250 = vld [vmem:[#allocation5 + $0x3e8] sm:$0xff]
    %v251 = vld [vmem:[#allocation5 + $0x3f0] sm:$0xff]
    %v252 = vld [vmem:[#allocation5 + $0x3f8] sm:$0xff]
    %v253 = vld [vmem:[#allocation5 + $0x400] sm:$0xff]
    %v254 = vld [vmem:[#allocation5 + $0x408] sm:$0xff]
    %v255 = vld [vmem:[#allocation5 + $0x410] sm:$0xff]
    %v256 = vld [vmem:[#allocation5 + $0x418] sm:$0xff]
    %v257 = vld [vmem:[#allocation5 + $0x420] sm:$0xff]
    %v258 = vld [vmem:[#allocation5 + $0x428] sm:$0xff]
    %v259 = vld [vmem:[#allocation5 + $0x430] sm:$0xff]
    %v260 = vld [vmem:[#allocation5 + $0x438] sm:$0xff]
    %v261 = vld [vmem:[#allocation5 + $0x440] sm:$0xff]
    %v262 = vld [vmem:[#allocation5 + $0x448] sm:$0xff]
    %v263 = vld [vmem:[#allocation5 + $0x450] sm:$0xff]
    %v264 = vld [vmem:[#allocation5 + $0x458] sm:$0xff]
    %v265 = vld [vmem:[#allocation5 + $0x460] sm:$0xff]
    %v266 = vld [vmem:[#allocation5 + $0x468] sm:$0xff]
    %v267 = vld [vmem:[#allocation5 + $0x470] sm:$0xff]
    %v268 = vld [vmem:[#allocation5 + $0x478] sm:$0xff]
    %v269 = vld [vmem:[#allocation5 + $0x480] sm:$0xff]
    %v270 = vld [vmem:[#allocation5 + $0x488] sm:$0xff]
    %v271 = vld [vmem:[#allocation5 + $0x490] sm:$0xff]
    %v272 = vld [vmem:[#allocation5 + $0x498] sm:$0xff]
    %v273 = vld [vmem:[#allocation5 + $0x4a0] sm:$0xff]
    %v274 = vld [vmem:[#allocation5 + $0x4a8] sm:$0xff]
    %v275 = vld [vmem:[#allocation5 + $0x4b0] sm:$0xff]
    %v276 = vld [vmem:[#allocation5 + $0x4b8] sm:$0xff]
    %v277 = vld [vmem:[#allocation5 + $0x4c0] sm:$0xff]
    %v278 = vld [vmem:[#allocation5 + $0x4c8] sm:$0xff]
    %v279 = vld [vmem:[#allocation5 + $0x4d0] sm:$0xff]
    %v280 = vld [vmem:[#allocation5 + $0x4d8] sm:$0xff]
    %v281 = vld [vmem:[#allocation5 + $0x4e0] sm:$0xff]
    %v282 = vld [vmem:[#allocation5 + $0x4e8] sm:$0xff]
    %v283 = vld [vmem:[#allocation5 + $0x4f0] sm:$0xff]
    %v284 = vld [vmem:[#allocation5 + $0x4f8] sm:$0xff]
    %v285 = vld [vmem:[#allocation5 + $0x500] sm:$0xff]
    %v286 = vld [vmem:[#allocation5 + $0x508] sm:$0xff]
    %v287 = vld [vmem:[#allocation5 + $0x510] sm:$0xff]
    %v288 = vld [vmem:[#allocation5 + $0x518] sm:$0xff]
    %v289 = vld [vmem:[#allocation5 + $0x520] sm:$0xff]
    %v290 = vld [vmem:[#allocation5 + $0x528] sm:$0xff]
    %v291 = vld [vmem:[#allocation5 + $0x530] sm:$0xff]
    %v292 = vld [vmem:[#allocation5 + $0x538] sm:$0xff]
    %v293 = vld [vmem:[#allocation5 + $0x540] sm:$0xff]
    %v294 = vld [vmem:[#allocation5 + $0x548] sm:$0xff]
    %v295 = vld [vmem:[#allocation5 + $0x550] sm:$0xff]
    %v296 = vld [vmem:[#allocation5 + $0x558] sm:$0xff]
    %v297 = vld [vmem:[#allocation5 + $0x560] sm:$0xff]
    %v298 = vld [vmem:[#allocation5 + $0x568] sm:$0xff]
    %v299 = vld [vmem:[#allocation5 + $0x570] sm:$0xff]
    %v300 = vld [vmem:[#allocation5 + $0x578] sm:$0xff]
    %v301 = vld [vmem:[#allocation5 + $0x580] sm:$0xff]
    %v302 = vld [vmem:[#allocation5 + $0x588] sm:$0xff]
    %v303 = vld [vmem:[#allocation5 + $0x590] sm:$0xff]
    %v304 = vld [vmem:[#allocation5 + $0x598] sm:$0xff]
    %v305 = vld [vmem:[#allocation5 + $0x5a0] sm:$0xff]
    %v306 = vld [vmem:[#allocation5 + $0x5a8] sm:$0xff]
    %v307 = vld [vmem:[#allocation5 + $0x5b0] sm:$0xff]
    %v308 = vld [vmem:[#allocation5 + $0x5b8] sm:$0xff]
    %v309 = vld [vmem:[#allocation5 + $0x5c0] sm:$0xff]
    %v310 = vld [vmem:[#allocation5 + $0x5c8] sm:$0xff]
    %v311 = vld [vmem:[#allocation5 + $0x5d0] sm:$0xff]
    %v312 = vld [vmem:[#allocation5 + $0x5d8] sm:$0xff]
    %v313 = vld [vmem:[#allocation5 + $0x5e0] sm:$0xff]
    %v314 = vld [vmem:[#allocation5 + $0x5e8] sm:$0xff]
    %v315 = vld [vmem:[#allocation5 + $0x5f0] sm:$0xff]
    %v316 = vld [vmem:[#allocation5 + $0x5f8] sm:$0xff]
    %v317 = vld [vmem:[#allocation5 + $0x600] sm:$0xff]
    %v318 = vld [vmem:[#allocation5 + $0x608] sm:$0xff]
    %v319 = vld [vmem:[#allocation5 + $0x610] sm:$0xff]
    %v320 = vld [vmem:[#allocation5 + $0x618] sm:$0xff]
    %v321 = vld [vmem:[#allocation5 + $0x620] sm:$0xff]
    %v322 = vld [vmem:[#allocation5 + $0x628] sm:$0xff]
    %v323 = vld [vmem:[#allocation5 + $0x630] sm:$0xff]
    %v324 = vld [vmem:[#allocation5 + $0x638] sm:$0xff]
    %v325 = vld [vmem:[#allocation5 + $0x640] sm:$0xff]
    %v326 = vld [vmem:[#allocation5 + $0x648] sm:$0xff]
    %v327 = vld [vmem:[#allocation5 + $0x650] sm:$0xff]
    %v328 = vld [vmem:[#allocation5 + $0x658] sm:$0xff]
    %v329 = vld [vmem:[#allocation5 + $0x660] sm:$0xff]
    %v330 = vld [vmem:[#allocation5 + $0x668] sm:$0xff]
    %v331 = vld [vmem:[#allocation5 + $0x670] sm:$0xff]
    %v332 = vld [vmem:[#allocation5 + $0x678] sm:$0xff]
    %v333 = vld [vmem:[#allocation5 + $0x680] sm:$0xff]
    %v334 = vld [vmem:[#allocation5 + $0x688] sm:$0xff]
    %v335 = vld [vmem:[#allocation5 + $0x690] sm:$0xff]
    %v336 = vld [vmem:[#allocation5 + $0x698] sm:$0xff]
    %v337 = vld [vmem:[#allocation5 + $0x6a0] sm:$0xff]
    %v338 = vld [vmem:[#allocation5 + $0x6a8] sm:$0xff]
    %v339 = vld [vmem:[#allocation5 + $0x6b0] sm:$0xff]
    %v340 = vld [vmem:[#allocation5 + $0x6b8] sm:$0xff]
    %v341 = vld [vmem:[#allocation5 + $0x6c0] sm:$0xff]
    %v342 = vld [vmem:[#allocation5 + $0x6c8] sm:$0xff]
    %v343 = vld [vmem:[#allocation5 + $0x6d0] sm:$0xff]
    %v344 = vld [vmem:[#allocation5 + $0x6d8] sm:$0xff]
    %v345 = vld [vmem:[#allocation5 + $0x6e0] sm:$0xff]
    %v346 = vld [vmem:[#allocation5 + $0x6e8] sm:$0xff]
    %v347 = vld [vmem:[#allocation5 + $0x6f0] sm:$0xff]
    %v348 = vld [vmem:[#allocation5 + $0x6f8] sm:$0xff]
    %v349 = vld [vmem:[#allocation5 + $0x700] sm:$0xff]
    %v350 = vld [vmem:[#allocation5 + $0x708] sm:$0xff]
    %v351 = vld [vmem:[#allocation5 + $0x710] sm:$0xff]
    %v352 = vld [vmem:[#allocation5 + $0x718] sm:$0xff]
    %v353 = vld [vmem:[#allocation5 + $0x720] sm:$0xff]
    %v354 = vld [vmem:[#allocation5 + $0x728] sm:$0xff]
    %v355 = vld [vmem:[#allocation5 + $0x730] sm:$0xff]
    %v356 = vld [vmem:[#allocation5 + $0x738] sm:$0xff]
    %v357 = vld [vmem:[#allocation5 + $0x740] sm:$0xff]
    %v358 = vld [vmem:[#allocation5 + $0x748] sm:$0xff]
    %v359 = vld [vmem:[#allocation5 + $0x750] sm:$0xff]
    %v360 = vld [vmem:[#allocation5 + $0x758] sm:$0xff]
    %v361 = vld [vmem:[#allocation5 + $0x760] sm:$0xff]
    %v362 = vld [vmem:[#allocation5 + $0x768] sm:$0xff]
    %v363 = vld [vmem:[#allocation5 + $0x770] sm:$0xff]
    %v364 = vld [vmem:[#allocation5 + $0x778] sm:$0xff]
    %v365 = vld [vmem:[#allocation5 + $0x780] sm:$0xff]
    %v366 = vld [vmem:[#allocation5 + $0x788] sm:$0xff]
    %v367 = vld [vmem:[#allocation5 + $0x790] sm:$0xff]
    %v368 = vld [vmem:[#allocation5 + $0x798] sm:$0xff]
    %v369 = vld [vmem:[#allocation5 + $0x7a0] sm:$0xff]
    %v370 = vld [vmem:[#allocation5 + $0x7a8] sm:$0xff]
    %v371 = vld [vmem:[#allocation5 + $0x7b0] sm:$0xff]
    %v372 = vld [vmem:[#allocation5 + $0x7b8] sm:$0xff]
    %v373 = vld [vmem:[#allocation5 + $0x7c0] sm:$0xff]
    %v374 = vld [vmem:[#allocation5 + $0x7c8] sm:$0xff]
    %v375 = vld [vmem:[#allocation5 + $0x7d0] sm:$0xff]
    %v376 = vld [vmem:[#allocation5 + $0x7d8] sm:$0xff]
    %v377 = vld [vmem:[#allocation5 + $0x7e0] sm:$0xff]
    %v378 = vld [vmem:[#allocation5 + $0x7e8] sm:$0xff]
    %v379 = vld [vmem:[#allocation5 + $0x7f0] sm:$0xff]
    %v380 = vld [vmem:[#allocation5 + $0x7f8] sm:$0xff]
    %v381 = vld [vmem:[#allocation5 + $0x800] sm:$0xff]
    %v382 = vld [vmem:[#allocation5 + $0x808] sm:$0xff]
    %v383 = vld [vmem:[#allocation5 + $0x810] sm:$0xff]
    %v384 = vld [vmem:[#allocation5 + $0x818] sm:$0xff]
    %v385 = vld [vmem:[#allocation5 + $0x820] sm:$0xff]
    %v386 = vld [vmem:[#allocation5 + $0x828] sm:$0xff]
    %v387 = vld [vmem:[#allocation5 + $0x830] sm:$0xff]
    %v388 = vld [vmem:[#allocation5 + $0x838] sm:$0xff]
    %v389 = vld [vmem:[#allocation5 + $0x840] sm:$0xff]
    %v390 = vld [vmem:[#allocation5 + $0x848] sm:$0xff]
    %v391 = vld [vmem:[#allocation5 + $0x850] sm:$0xff]
    %v392 = vld [vmem:[#allocation5 + $0x858] sm:$0xff]
    %v393 = vld [vmem:[#allocation5 + $0x860] sm:$0xff]
    %v394 = vld [vmem:[#allocation5 + $0x868] sm:$0xff]
    %v395 = vld [vmem:[#allocation5 + $0x870] sm:$0xff]
    %v396 = vld [vmem:[#allocation5 + $0x878] sm:$0xff]
    %v397 = vld [vmem:[#allocation5 + $0x880] sm:$0xff]
    %v398 = vld [vmem:[#allocation5 + $0x888] sm:$0xff]
    %v399 = vld [vmem:[#allocation5 + $0x890] sm:$0xff]
    %v400 = vld [vmem:[#allocation5 + $0x898] sm:$0xff]
    %v401 = vld [vmem:[#allocation5 + $0x8a0] sm:$0xff]
    %v402 = vld [vmem:[#allocation5 + $0x8a8] sm:$0xff]
    %v403 = vld [vmem:[#allocation5 + $0x8b0] sm:$0xff]
    %v404 = vld [vmem:[#allocation5 + $0x8b8] sm:$0xff]
    %v405 = vld [vmem:[#allocation5 + $0x8c0] sm:$0xff]
    %v406 = vld [vmem:[#allocation5 + $0x8c8] sm:$0xff]
    %v407 = vld [vmem:[#allocation5 + $0x8d0] sm:$0xff]
    %v408 = vld [vmem:[#allocation5 + $0x8d8] sm:$0xff]
    %v409 = vld [vmem:[#allocation5 + $0x8e0] sm:$0xff]
    %v410 = vld [vmem:[#allocation5 + $0x8e8] sm:$0xff]
    %v411 = vld [vmem:[#allocation5 + $0x8f0] sm:$0xff]
    %v412 = vld [vmem:[#allocation5 + $0x8f8] sm:$0xff]
    %v413 = vld [vmem:[#allocation7] sm:$0x3f]
    %v415 = vlaneseq
    %v416 = vshrl.u32 %v415, 7
    %v417 = vsub.s32 0, %v416
    %v418 = vrot.slane %v413, %v417
    %v419 = vlaneseq
    %v420 = vshrl.u32 %v419, 7
    %v421 = vsub.s32 1, %v420
    %v422 = vrot.slane %v413, %v421
    %v423 = vlaneseq
    %v424 = vshrl.u32 %v423, 7
    %v425 = vsub.s32 2, %v424
    %v426 = vrot.slane %v413, %v425
    %v427 = vlaneseq
    %v428 = vshrl.u32 %v427, 7
    %v429 = vsub.s32 3, %v428
    %v430 = vrot.slane %v413, %v429
    %v431 = vlaneseq
    %v432 = vshrl.u32 %v431, 7
    %v433 = vsub.s32 4, %v432
    %v434 = vrot.slane %v413, %v433
    %v435 = vlaneseq
    %v436 = vshrl.u32 %v435, 7
    %v437 = vsub.s32 5, %v436
    %v438 = vrot.slane %v413, %v437
    %v733 = vunpack.c.l.b16 %v125
    %v734 = vunpack.c.h.b16 %v125
    %v735 = vunpack.c.l.b16 %v126
    %v736 = vunpack.c.h.b16 %v126
    %v737 = vunpack.c.l.b16 %v127
    %v738 = vunpack.c.h.b16 %v127
    %v739 = vunpack.c.l.b16 %v128
    %v740 = vunpack.c.h.b16 %v128
    %v741 = vunpack.c.l.b16 %v129
    %v742 = vunpack.c.h.b16 %v129
    %v743 = vunpack.c.l.b16 %v130
    %v744 = vunpack.c.h.b16 %v130
    %v745 = vunpack.c.l.b16 %v131
    %v746 = vunpack.c.h.b16 %v131
    %v747 = vunpack.c.l.b16 %v132
    %v748 = vunpack.c.h.b16 %v132
    %v749 = vunpack.c.l.b16 %v133
    %v750 = vunpack.c.h.b16 %v133
    %v751 = vunpack.c.l.b16 %v134
    %v752 = vunpack.c.h.b16 %v134
    %v753 = vunpack.c.l.b16 %v135
    %v754 = vunpack.c.h.b16 %v135
    %v755 = vunpack.c.l.b16 %v136
    %v756 = vunpack.c.h.b16 %v136
    %v757 = vunpack.c.l.b16 %v137
    %v758 = vunpack.c.h.b16 %v137
    %v759 = vunpack.c.l.b16 %v138
    %v760 = vunpack.c.h.b16 %v138
    %v761 = vunpack.c.l.b16 %v139
    %v762 = vunpack.c.h.b16 %v139
    %v763 = vunpack.c.l.b16 %v140
    %v764 = vunpack.c.h.b16 %v140
    %v765 = vunpack.c.l.b16 %v141
    %v766 = vunpack.c.h.b16 %v141
    %v767 = vunpack.c.l.b16 %v142
    %v768 = vunpack.c.h.b16 %v142
    %v769 = vunpack.c.l.b16 %v143
    %v770 = vunpack.c.h.b16 %v143
    %v771 = vunpack.c.l.b16 %v144
    %v772 = vunpack.c.h.b16 %v144
    %v773 = vunpack.c.l.b16 %v145
    %v774 = vunpack.c.h.b16 %v145
    %v775 = vunpack.c.l.b16 %v146
    %v776 = vunpack.c.h.b16 %v146
    %v777 = vunpack.c.l.b16 %v147
    %v778 = vunpack.c.h.b16 %v147
    %v779 = vunpack.c.l.b16 %v148
    %v780 = vunpack.c.h.b16 %v148
    %v781 = vunpack.c.l.b16 %v149
    %v782 = vunpack.c.h.b16 %v149
    %v783 = vunpack.c.l.b16 %v150
    %v784 = vunpack.c.h.b16 %v150
    %v785 = vunpack.c.l.b16 %v151
    %v786 = vunpack.c.h.b16 %v151
    %v787 = vunpack.c.l.b16 %v152
    %v788 = vunpack.c.h.b16 %v152
    %v789 = vunpack.c.l.b16 %v153
    %v790 = vunpack.c.h.b16 %v153
    %v791 = vunpack.c.l.b16 %v154
    %v792 = vunpack.c.h.b16 %v154
    %v793 = vunpack.c.l.b16 %v155
    %v794 = vunpack.c.h.b16 %v155
    %v795 = vunpack.c.l.b16 %v156
    %v796 = vunpack.c.h.b16 %v156
    %v797 = vunpack.c.l.b16 %v157
    %v798 = vunpack.c.h.b16 %v157
    %v799 = vunpack.c.l.b16 %v158
    %v800 = vunpack.c.h.b16 %v158
    %v801 = vunpack.c.l.b16 %v159
    %v802 = vunpack.c.h.b16 %v159
    %v803 = vunpack.c.l.b16 %v160
    %v804 = vunpack.c.h.b16 %v160
    %v805 = vunpack.c.l.b16 %v161
    %v806 = vunpack.c.h.b16 %v161
    %v807 = vunpack.c.l.b16 %v162
    %v808 = vunpack.c.h.b16 %v162
    %v809 = vunpack.c.l.b16 %v163
    %v810 = vunpack.c.h.b16 %v163
    %v811 = vunpack.c.l.b16 %v164
    %v812 = vunpack.c.h.b16 %v164
    %v813 = vunpack.c.l.b16 %v165
    %v814 = vunpack.c.h.b16 %v165
    %v815 = vunpack.c.l.b16 %v166
    %v816 = vunpack.c.h.b16 %v166
    %v817 = vunpack.c.l.b16 %v167
    %v818 = vunpack.c.h.b16 %v167
    %v819 = vunpack.c.l.b16 %v168
    %v820 = vunpack.c.h.b16 %v168
    %v821 = vunpack.c.l.b16 %v169
    %v822 = vunpack.c.h.b16 %v169
    %v823 = vunpack.c.l.b16 %v170
    %v824 = vunpack.c.h.b16 %v170
    %v825 = vunpack.c.l.b16 %v171
    %v826 = vunpack.c.h.b16 %v171
    %v827 = vunpack.c.l.b16 %v172
    %v828 = vunpack.c.h.b16 %v172
    %v829 = vunpack.c.l.b16 %v173
    %v830 = vunpack.c.h.b16 %v173
    %v831 = vunpack.c.l.b16 %v174
    %v832 = vunpack.c.h.b16 %v174
    %v833 = vunpack.c.l.b16 %v175
    %v834 = vunpack.c.h.b16 %v175
    %v835 = vunpack.c.l.b16 %v176
    %v836 = vunpack.c.h.b16 %v176
    %v837 = vunpack.c.l.b16 %v177
    %v838 = vunpack.c.h.b16 %v177
    %v839 = vunpack.c.l.b16 %v178
    %v840 = vunpack.c.h.b16 %v178
    %v841 = vunpack.c.l.b16 %v179
    %v842 = vunpack.c.h.b16 %v179
    %v843 = vunpack.c.l.b16 %v180
    %v844 = vunpack.c.h.b16 %v180
    %v845 = vunpack.c.l.b16 %v181
    %v846 = vunpack.c.h.b16 %v181
    %v847 = vunpack.c.l.b16 %v182
    %v848 = vunpack.c.h.b16 %v182
    %v849 = vunpack.c.l.b16 %v183
    %v850 = vunpack.c.h.b16 %v183
    %v851 = vunpack.c.l.b16 %v184
    %v852 = vunpack.c.h.b16 %v184
    %v853 = vunpack.c.l.b16 %v185
    %v854 = vunpack.c.h.b16 %v185
    %v855 = vunpack.c.l.b16 %v186
    %v856 = vunpack.c.h.b16 %v186
    %v857 = vunpack.c.l.b16 %v187
    %v858 = vunpack.c.h.b16 %v187
    %v859 = vunpack.c.l.b16 %v188
    %v860 = vunpack.c.h.b16 %v188
    %v861 = vunpack.c.l.b16 %v189
    %v862 = vunpack.c.h.b16 %v189
    %v863 = vunpack.c.l.b16 %v190
    %v864 = vunpack.c.h.b16 %v190
    %v865 = vunpack.c.l.b16 %v191
    %v866 = vunpack.c.h.b16 %v191
    %v867 = vunpack.c.l.b16 %v192
    %v868 = vunpack.c.h.b16 %v192
    %v869 = vunpack.c.l.b16 %v193
    %v870 = vunpack.c.h.b16 %v193
    %v871 = vunpack.c.l.b16 %v194
    %v872 = vunpack.c.h.b16 %v194
    %v873 = vunpack.c.l.b16 %v195
    %v874 = vunpack.c.h.b16 %v195
    %v875 = vunpack.c.l.b16 %v196
    %v876 = vunpack.c.h.b16 %v196
    %v877 = vunpack.c.l.b16 %v197
    %v878 = vunpack.c.h.b16 %v197
    %v879 = vunpack.c.l.b16 %v198
    %v880 = vunpack.c.h.b16 %v198
    %v881 = vunpack.c.l.b16 %v199
    %v882 = vunpack.c.h.b16 %v199
    %v883 = vunpack.c.l.b16 %v200
    %v884 = vunpack.c.h.b16 %v200
    %v885 = vunpack.c.l.b16 %v201
    %v886 = vunpack.c.h.b16 %v201
    %v887 = vunpack.c.l.b16 %v202
    %v888 = vunpack.c.h.b16 %v202
    %v889 = vunpack.c.l.b16 %v203
    %v890 = vunpack.c.h.b16 %v203
    %v891 = vunpack.c.l.b16 %v204
    %v892 = vunpack.c.h.b16 %v204
    %v893 = vunpack.c.l.b16 %v205
    %v894 = vunpack.c.h.b16 %v205
    %v895 = vunpack.c.l.b16 %v206
    %v896 = vunpack.c.h.b16 %v206
    %v897 = vunpack.c.l.b16 %v207
    %v898 = vunpack.c.h.b16 %v207
    %v899 = vunpack.c.l.b16 %v208
    %v900 = vunpack.c.h.b16 %v208
    %v901 = vunpack.c.l.b16 %v209
    %v902 = vunpack.c.h.b16 %v209
    %v903 = vunpack.c.l.b16 %v210
    %v904 = vunpack.c.h.b16 %v210
    %v905 = vunpack.c.l.b16 %v211
    %v906 = vunpack.c.h.b16 %v211
    %v907 = vunpack.c.l.b16 %v212
    %v908 = vunpack.c.h.b16 %v212
    %v909 = vunpack.c.l.b16 %v213
    %v910 = vunpack.c.h.b16 %v213
    %v911 = vunpack.c.l.b16 %v214
    %v912 = vunpack.c.h.b16 %v214
    %v913 = vunpack.c.l.b16 %v215
    %v914 = vunpack.c.h.b16 %v215
    %v915 = vunpack.c.l.b16 %v216
    %v916 = vunpack.c.h.b16 %v216
    %v917 = vunpack.c.l.b16 %v217
    %v918 = vunpack.c.h.b16 %v217
    %v919 = vunpack.c.l.b16 %v218
    %v920 = vunpack.c.h.b16 %v218
    %v921 = vunpack.c.l.b16 %v219
    %v922 = vunpack.c.h.b16 %v219
    %v923 = vunpack.c.l.b16 %v220
    %v924 = vunpack.c.h.b16 %v220
    %v925 = vunpack.c.l.b16 %v221
    %v926 = vunpack.c.h.b16 %v221
    %v927 = vunpack.c.l.b16 %v222
    %v928 = vunpack.c.h.b16 %v222
    %v929 = vunpack.c.l.b16 %v223
    %v930 = vunpack.c.h.b16 %v223
    %v931 = vunpack.c.l.b16 %v224
    %v932 = vunpack.c.h.b16 %v224
    %v933 = vunpack.c.l.b16 %v225
    %v934 = vunpack.c.h.b16 %v225
    %v935 = vunpack.c.l.b16 %v226
    %v936 = vunpack.c.h.b16 %v226
    %v937 = vunpack.c.l.b16 %v227
    %v938 = vunpack.c.h.b16 %v227
    %v939 = vunpack.c.l.b16 %v228
    %v940 = vunpack.c.h.b16 %v228
    %v941 = vunpack.c.l.b16 %v229
    %v942 = vunpack.c.h.b16 %v229
    %v943 = vunpack.c.l.b16 %v230
    %v944 = vunpack.c.h.b16 %v230
    %v945 = vunpack.c.l.b16 %v231
    %v946 = vunpack.c.h.b16 %v231
    %v947 = vunpack.c.l.b16 %v232
    %v948 = vunpack.c.h.b16 %v232
    %v949 = vunpack.c.l.b16 %v233
    %v950 = vunpack.c.h.b16 %v233
    %v951 = vunpack.c.l.b16 %v234
    %v952 = vunpack.c.h.b16 %v234
    %v953 = vunpack.c.l.b16 %v235
    %v954 = vunpack.c.h.b16 %v235
    %v955 = vunpack.c.l.b16 %v236
    %v956 = vunpack.c.h.b16 %v236
    %v957 = vunpack.c.l.b16 %v237
    %v958 = vunpack.c.h.b16 %v237
    %v959 = vunpack.c.l.b16 %v238
    %v960 = vunpack.c.h.b16 %v238
    %v961 = vunpack.c.l.b16 %v239
    %v962 = vunpack.c.h.b16 %v239
    %v963 = vunpack.c.l.b16 %v240
    %v964 = vunpack.c.h.b16 %v240
    %v965 = vunpack.c.l.b16 %v241
    %v966 = vunpack.c.h.b16 %v241
    %v967 = vunpack.c.l.b16 %v242
    %v968 = vunpack.c.h.b16 %v242
    %v969 = vunpack.c.l.b16 %v243
    %v970 = vunpack.c.h.b16 %v243
    %v971 = vunpack.c.l.b16 %v244
    %v972 = vunpack.c.h.b16 %v244
    %v973 = vunpack.c.l.b16 %v245
    %v974 = vunpack.c.h.b16 %v245
    %v975 = vunpack.c.l.b16 %v246
    %v976 = vunpack.c.h.b16 %v246
    %v977 = vunpack.c.l.b16 %v247
    %v978 = vunpack.c.h.b16 %v247
    %v979 = vunpack.c.l.b16 %v248
    %v980 = vunpack.c.h.b16 %v248
    %v981 = vunpack.c.l.b16 %v249
    %v982 = vunpack.c.h.b16 %v249
    %v983 = vunpack.c.l.b16 %v250
    %v984 = vunpack.c.h.b16 %v250
    %v985 = vunpack.c.l.b16 %v251
    %v986 = vunpack.c.h.b16 %v251
    %v987 = vunpack.c.l.b16 %v252
    %v988 = vunpack.c.h.b16 %v252
    %v989 = vunpack.c.l.b16 %v253
    %v990 = vunpack.c.h.b16 %v253
    %v991 = vunpack.c.l.b16 %v254
    %v992 = vunpack.c.h.b16 %v254
    %v993 = vunpack.c.l.b16 %v255
    %v994 = vunpack.c.h.b16 %v255
    %v995 = vunpack.c.l.b16 %v256
    %v996 = vunpack.c.h.b16 %v256
    %v997 = vunpack.c.l.b16 %v257
    %v998 = vunpack.c.h.b16 %v257
    %v999 = vunpack.c.l.b16 %v258
    %v1000 = vunpack.c.h.b16 %v258
    %v1001 = vunpack.c.l.b16 %v259
    %v1002 = vunpack.c.h.b16 %v259
    %v1003 = vunpack.c.l.b16 %v260
    %v1004 = vunpack.c.h.b16 %v260
    %v1005 = vunpack.c.l.b16 %v261
    %v1006 = vunpack.c.h.b16 %v261
    %v1007 = vunpack.c.l.b16 %v262
    %v1008 = vunpack.c.h.b16 %v262
    %v1009 = vunpack.c.l.b16 %v263
    %v1010 = vunpack.c.h.b16 %v263
    %v1011 = vunpack.c.l.b16 %v264
    %v1012 = vunpack.c.h.b16 %v264
    %v1013 = vunpack.c.l.b16 %v265
    %v1014 = vunpack.c.h.b16 %v265
    %v1015 = vunpack.c.l.b16 %v266
    %v1016 = vunpack.c.h.b16 %v266
    %v1017 = vunpack.c.l.b16 %v267
    %v1018 = vunpack.c.h.b16 %v267
    %v1019 = vunpack.c.l.b16 %v268
    %v1020 = vunpack.c.h.b16 %v268
    %v1021 = vunpack.c.l.b16 %v269
    %v1022 = vunpack.c.h.b16 %v269
    %v1023 = vunpack.c.l.b16 %v270
    %v1024 = vunpack.c.h.b16 %v270
    %v1025 = vunpack.c.l.b16 %v271
    %v1026 = vunpack.c.h.b16 %v271
    %v1027 = vunpack.c.l.b16 %v272
    %v1028 = vunpack.c.h.b16 %v272
    %v1029 = vunpack.c.l.b16 %v273
    %v1030 = vunpack.c.h.b16 %v273
    %v1031 = vunpack.c.l.b16 %v274
    %v1032 = vunpack.c.h.b16 %v274
    %v1033 = vunpack.c.l.b16 %v275
    %v1034 = vunpack.c.h.b16 %v275
    %v1035 = vunpack.c.l.b16 %v276
    %v1036 = vunpack.c.h.b16 %v276
    %v1037 = vunpack.c.l.b16 %v277
    %v1038 = vunpack.c.h.b16 %v277
    %v1039 = vunpack.c.l.b16 %v278
    %v1040 = vunpack.c.h.b16 %v278
    %v1041 = vunpack.c.l.b16 %v279
    %v1042 = vunpack.c.h.b16 %v279
    %v1043 = vunpack.c.l.b16 %v280
    %v1044 = vunpack.c.h.b16 %v280
    %v1045 = vunpack.c.l.b16 %v281
    %v1046 = vunpack.c.h.b16 %v281
    %v1047 = vunpack.c.l.b16 %v282
    %v1048 = vunpack.c.h.b16 %v282
    %v1049 = vunpack.c.l.b16 %v283
    %v1050 = vunpack.c.h.b16 %v283
    %v1051 = vunpack.c.l.b16 %v284
    %v1052 = vunpack.c.h.b16 %v284
    %v1053 = vunpack.c.l.b16 %v285
    %v1054 = vunpack.c.h.b16 %v285
    %v1055 = vunpack.c.l.b16 %v286
    %v1056 = vunpack.c.h.b16 %v286
    %v1057 = vunpack.c.l.b16 %v287
    %v1058 = vunpack.c.h.b16 %v287
    %v1059 = vunpack.c.l.b16 %v288
    %v1060 = vunpack.c.h.b16 %v288
    %v1061 = vunpack.c.l.b16 %v289
    %v1062 = vunpack.c.h.b16 %v289
    %v1063 = vunpack.c.l.b16 %v290
    %v1064 = vunpack.c.h.b16 %v290
    %v1065 = vunpack.c.l.b16 %v291
    %v1066 = vunpack.c.h.b16 %v291
    %v1067 = vunpack.c.l.b16 %v292
    %v1068 = vunpack.c.h.b16 %v292
    %v1069 = vunpack.c.l.b16 %v293
    %v1070 = vunpack.c.h.b16 %v293
    %v1071 = vunpack.c.l.b16 %v294
    %v1072 = vunpack.c.h.b16 %v294
    %v1073 = vunpack.c.l.b16 %v295
    %v1074 = vunpack.c.h.b16 %v295
    %v1075 = vunpack.c.l.b16 %v296
    %v1076 = vunpack.c.h.b16 %v296
    %v1077 = vunpack.c.l.b16 %v297
    %v1078 = vunpack.c.h.b16 %v297
    %v1079 = vunpack.c.l.b16 %v298
    %v1080 = vunpack.c.h.b16 %v298
    %v1081 = vunpack.c.l.b16 %v299
    %v1082 = vunpack.c.h.b16 %v299
    %v1083 = vunpack.c.l.b16 %v300
    %v1084 = vunpack.c.h.b16 %v300
    %v1085 = vunpack.c.l.b16 %v301
    %v1086 = vunpack.c.h.b16 %v301
    %v1087 = vunpack.c.l.b16 %v302
    %v1088 = vunpack.c.h.b16 %v302
    %v1089 = vunpack.c.l.b16 %v303
    %v1090 = vunpack.c.h.b16 %v303
    %v1091 = vunpack.c.l.b16 %v304
    %v1092 = vunpack.c.h.b16 %v304
    %v1093 = vunpack.c.l.b16 %v305
    %v1094 = vunpack.c.h.b16 %v305
    %v1095 = vunpack.c.l.b16 %v306
    %v1096 = vunpack.c.h.b16 %v306
    %v1097 = vunpack.c.l.b16 %v307
    %v1098 = vunpack.c.h.b16 %v307
    %v1099 = vunpack.c.l.b16 %v308
    %v1100 = vunpack.c.h.b16 %v308
    %v1101 = vunpack.c.l.b16 %v309
    %v1102 = vunpack.c.h.b16 %v309
    %v1103 = vunpack.c.l.b16 %v310
    %v1104 = vunpack.c.h.b16 %v310
    %v1105 = vunpack.c.l.b16 %v311
    %v1106 = vunpack.c.h.b16 %v311
    %v1107 = vunpack.c.l.b16 %v312
    %v1108 = vunpack.c.h.b16 %v312
    %v1109 = vunpack.c.l.b16 %v313
    %v1110 = vunpack.c.h.b16 %v313
    %v1111 = vunpack.c.l.b16 %v314
    %v1112 = vunpack.c.h.b16 %v314
    %v1113 = vunpack.c.l.b16 %v315
    %v1114 = vunpack.c.h.b16 %v315
    %v1115 = vunpack.c.l.b16 %v316
    %v1116 = vunpack.c.h.b16 %v316
    %v1117 = vunpack.c.l.b16 %v317
    %v1118 = vunpack.c.h.b16 %v317
    %v1119 = vunpack.c.l.b16 %v318
    %v1120 = vunpack.c.h.b16 %v318
    %v1121 = vunpack.c.l.b16 %v319
    %v1122 = vunpack.c.h.b16 %v319
    %v1123 = vunpack.c.l.b16 %v320
    %v1124 = vunpack.c.h.b16 %v320
    %v1125 = vunpack.c.l.b16 %v321
    %v1126 = vunpack.c.h.b16 %v321
    %v1127 = vunpack.c.l.b16 %v322
    %v1128 = vunpack.c.h.b16 %v322
    %v1129 = vunpack.c.l.b16 %v323
    %v1130 = vunpack.c.h.b16 %v323
    %v1131 = vunpack.c.l.b16 %v324
    %v1132 = vunpack.c.h.b16 %v324
    %v1133 = vunpack.c.l.b16 %v325
    %v1134 = vunpack.c.h.b16 %v325
    %v1135 = vunpack.c.l.b16 %v326
    %v1136 = vunpack.c.h.b16 %v326
    %v1137 = vunpack.c.l.b16 %v327
    %v1138 = vunpack.c.h.b16 %v327
    %v1139 = vunpack.c.l.b16 %v328
    %v1140 = vunpack.c.h.b16 %v328
    %v1141 = vunpack.c.l.b16 %v329
    %v1142 = vunpack.c.h.b16 %v329
    %v1143 = vunpack.c.l.b16 %v330
    %v1144 = vunpack.c.h.b16 %v330
    %v1145 = vunpack.c.l.b16 %v331
    %v1146 = vunpack.c.h.b16 %v331
    %v1147 = vunpack.c.l.b16 %v332
    %v1148 = vunpack.c.h.b16 %v332
    %v1149 = vunpack.c.l.b16 %v333
    %v1150 = vunpack.c.h.b16 %v333
    %v1151 = vunpack.c.l.b16 %v334
    %v1152 = vunpack.c.h.b16 %v334
    %v1153 = vunpack.c.l.b16 %v335
    %v1154 = vunpack.c.h.b16 %v335
    %v1155 = vunpack.c.l.b16 %v336
    %v1156 = vunpack.c.h.b16 %v336
    %v1157 = vunpack.c.l.b16 %v337
    %v1158 = vunpack.c.h.b16 %v337
    %v1159 = vunpack.c.l.b16 %v338
    %v1160 = vunpack.c.h.b16 %v338
    %v1161 = vunpack.c.l.b16 %v339
    %v1162 = vunpack.c.h.b16 %v339
    %v1163 = vunpack.c.l.b16 %v340
    %v1164 = vunpack.c.h.b16 %v340
    %v1165 = vunpack.c.l.b16 %v341
    %v1166 = vunpack.c.h.b16 %v341
    %v1167 = vunpack.c.l.b16 %v342
    %v1168 = vunpack.c.h.b16 %v342
    %v1169 = vunpack.c.l.b16 %v343
    %v1170 = vunpack.c.h.b16 %v343
    %v1171 = vunpack.c.l.b16 %v344
    %v1172 = vunpack.c.h.b16 %v344
    %v1173 = vunpack.c.l.b16 %v345
    %v1174 = vunpack.c.h.b16 %v345
    %v1175 = vunpack.c.l.b16 %v346
    %v1176 = vunpack.c.h.b16 %v346
    %v1177 = vunpack.c.l.b16 %v347
    %v1178 = vunpack.c.h.b16 %v347
    %v1179 = vunpack.c.l.b16 %v348
    %v1180 = vunpack.c.h.b16 %v348
    %v1181 = vunpack.c.l.b16 %v349
    %v1182 = vunpack.c.h.b16 %v349
    %v1183 = vunpack.c.l.b16 %v350
    %v1184 = vunpack.c.h.b16 %v350
    %v1185 = vunpack.c.l.b16 %v351
    %v1186 = vunpack.c.h.b16 %v351
    %v1187 = vunpack.c.l.b16 %v352
    %v1188 = vunpack.c.h.b16 %v352
    %v1189 = vunpack.c.l.b16 %v353
    %v1190 = vunpack.c.h.b16 %v353
    %v1191 = vunpack.c.l.b16 %v354
    %v1192 = vunpack.c.h.b16 %v354
    %v1193 = vunpack.c.l.b16 %v355
    %v1194 = vunpack.c.h.b16 %v355
    %v1195 = vunpack.c.l.b16 %v356
    %v1196 = vunpack.c.h.b16 %v356
    %v1197 = vunpack.c.l.b16 %v357
    %v1198 = vunpack.c.h.b16 %v357
    %v1199 = vunpack.c.l.b16 %v358
    %v1200 = vunpack.c.h.b16 %v358
    %v1201 = vunpack.c.l.b16 %v359
    %v1202 = vunpack.c.h.b16 %v359
    %v1203 = vunpack.c.l.b16 %v360
    %v1204 = vunpack.c.h.b16 %v360
    %v1205 = vunpack.c.l.b16 %v361
    %v1206 = vunpack.c.h.b16 %v361
    %v1207 = vunpack.c.l.b16 %v362
    %v1208 = vunpack.c.h.b16 %v362
    %v1209 = vunpack.c.l.b16 %v363
    %v1210 = vunpack.c.h.b16 %v363
    %v1211 = vunpack.c.l.b16 %v364
    %v1212 = vunpack.c.h.b16 %v364
    %v1213 = vunpack.c.l.b16 %v365
    %v1214 = vunpack.c.h.b16 %v365
    %v1215 = vunpack.c.l.b16 %v366
    %v1216 = vunpack.c.h.b16 %v366
    %v1217 = vunpack.c.l.b16 %v367
    %v1218 = vunpack.c.h.b16 %v367
    %v1219 = vunpack.c.l.b16 %v368
    %v1220 = vunpack.c.h.b16 %v368
    %v1221 = vunpack.c.l.b16 %v369
    %v1222 = vunpack.c.h.b16 %v369
    %v1223 = vunpack.c.l.b16 %v370
    %v1224 = vunpack.c.h.b16 %v370
    %v1225 = vunpack.c.l.b16 %v371
    %v1226 = vunpack.c.h.b16 %v371
    %v1227 = vunpack.c.l.b16 %v372
    %v1228 = vunpack.c.h.b16 %v372
    %v1229 = vunpack.c.l.b16 %v373
    %v1230 = vunpack.c.h.b16 %v373
    %v1231 = vunpack.c.l.b16 %v374
    %v1232 = vunpack.c.h.b16 %v374
    %v1233 = vunpack.c.l.b16 %v375
    %v1234 = vunpack.c.h.b16 %v375
    %v1235 = vunpack.c.l.b16 %v376
    %v1236 = vunpack.c.h.b16 %v376
    %v1237 = vunpack.c.l.b16 %v377
    %v1238 = vunpack.c.h.b16 %v377
    %v1239 = vunpack.c.l.b16 %v378
    %v1240 = vunpack.c.h.b16 %v378
    %v1241 = vunpack.c.l.b16 %v379
    %v1242 = vunpack.c.h.b16 %v379
    %v1243 = vunpack.c.l.b16 %v380
    %v1244 = vunpack.c.h.b16 %v380
    %v1245 = vunpack.c.l.b16 %v381
    %v1246 = vunpack.c.h.b16 %v381
    %v1247 = vunpack.c.l.b16 %v382
    %v1248 = vunpack.c.h.b16 %v382
    %v1249 = vunpack.c.l.b16 %v383
    %v1250 = vunpack.c.h.b16 %v383
    %v1251 = vunpack.c.l.b16 %v384
    %v1252 = vunpack.c.h.b16 %v384
    %v1253 = vunpack.c.l.b16 %v385
    %v1254 = vunpack.c.h.b16 %v385
    %v1255 = vunpack.c.l.b16 %v386
    %v1256 = vunpack.c.h.b16 %v386
    %v1257 = vunpack.c.l.b16 %v387
    %v1258 = vunpack.c.h.b16 %v387
    %v1259 = vunpack.c.l.b16 %v388
    %v1260 = vunpack.c.h.b16 %v388
    %v1261 = vunpack.c.l.b16 %v389
    %v1262 = vunpack.c.h.b16 %v389
    %v1263 = vunpack.c.l.b16 %v390
    %v1264 = vunpack.c.h.b16 %v390
    %v1265 = vunpack.c.l.b16 %v391
    %v1266 = vunpack.c.h.b16 %v391
    %v1267 = vunpack.c.l.b16 %v392
    %v1268 = vunpack.c.h.b16 %v392
    %v1269 = vunpack.c.l.b16 %v393
    %v1270 = vunpack.c.h.b16 %v393
    %v1271 = vunpack.c.l.b16 %v394
    %v1272 = vunpack.c.h.b16 %v394
    %v1273 = vunpack.c.l.b16 %v395
    %v1274 = vunpack.c.h.b16 %v395
    %v1275 = vunpack.c.l.b16 %v396
    %v1276 = vunpack.c.h.b16 %v396
    %v1277 = vunpack.c.l.b16 %v397
    %v1278 = vunpack.c.h.b16 %v397
    %v1279 = vunpack.c.l.b16 %v398
    %v1280 = vunpack.c.h.b16 %v398
    %v1281 = vunpack.c.l.b16 %v399
    %v1282 = vunpack.c.h.b16 %v399
    %v1283 = vunpack.c.l.b16 %v400
    %v1284 = vunpack.c.h.b16 %v400
    %v1285 = vunpack.c.l.b16 %v401
    %v1286 = vunpack.c.h.b16 %v401
    %v1287 = vunpack.c.l.b16 %v402
    %v1288 = vunpack.c.h.b16 %v402
    %v1289 = vunpack.c.l.b16 %v403
    %v1290 = vunpack.c.h.b16 %v403
    %v1291 = vunpack.c.l.b16 %v404
    %v1292 = vunpack.c.h.b16 %v404
    %v1293 = vunpack.c.l.b16 %v405
    %v1294 = vunpack.c.h.b16 %v405
    %v1295 = vunpack.c.l.b16 %v406
    %v1296 = vunpack.c.h.b16 %v406
    %v1297 = vunpack.c.l.b16 %v407
    %v1298 = vunpack.c.h.b16 %v407
    %v1299 = vunpack.c.l.b16 %v408
    %v1300 = vunpack.c.h.b16 %v408
    %v1301 = vunpack.c.l.b16 %v409
    %v1302 = vunpack.c.h.b16 %v409
    %v1303 = vunpack.c.l.b16 %v410
    %v1304 = vunpack.c.h.b16 %v410
    %v1305 = vunpack.c.l.b16 %v411
    %v1306 = vunpack.c.h.b16 %v411
    %v1307 = vunpack.c.l.b16 %v412
    %v1308 = vunpack.c.h.b16 %v412
    %v1309 = vpack.c.b16 %v739, %v733
    %v1310 = vpack.c.b16 %v740, %v734
    %v1311 = vpack.c.b16 %v741, %v735
    %v1312 = vpack.c.b16 %v742, %v736
    %v1313 = vpack.c.b16 %v743, %v737
    %v1314 = vpack.c.b16 %v744, %v738
    %v1315 = vpack.c.b16 %v751, %v745
    %v1316 = vpack.c.b16 %v752, %v746
    %v1317 = vpack.c.b16 %v753, %v747
    %v1318 = vpack.c.b16 %v754, %v748
    %v1319 = vpack.c.b16 %v755, %v749
    %v1320 = vpack.c.b16 %v756, %v750
    %v1321 = vpack.c.b16 %v763, %v757
    %v1322 = vpack.c.b16 %v764, %v758
    %v1323 = vpack.c.b16 %v765, %v759
    %v1324 = vpack.c.b16 %v766, %v760
    %v1325 = vpack.c.b16 %v767, %v761
    %v1326 = vpack.c.b16 %v768, %v762
    %v1327 = vpack.c.b16 %v775, %v769
    %v1328 = vpack.c.b16 %v776, %v770
    %v1329 = vpack.c.b16 %v777, %v771
    %v1330 = vpack.c.b16 %v778, %v772
    %v1331 = vpack.c.b16 %v779, %v773
    %v1332 = vpack.c.b16 %v780, %v774
    %v1333 = vpack.c.b16 %v787, %v781
    %v1334 = vpack.c.b16 %v788, %v782
    %v1335 = vpack.c.b16 %v789, %v783
    %v1336 = vpack.c.b16 %v790, %v784
    %v1337 = vpack.c.b16 %v791, %v785
    %v1338 = vpack.c.b16 %v792, %v786
    %v1339 = vpack.c.b16 %v799, %v793
    %v1340 = vpack.c.b16 %v800, %v794
    %v1341 = vpack.c.b16 %v801, %v795
    %v1342 = vpack.c.b16 %v802, %v796
    %v1343 = vpack.c.b16 %v803, %v797
    %v1344 = vpack.c.b16 %v804, %v798
    %v1345 = vpack.c.b16 %v811, %v805
    %v1346 = vpack.c.b16 %v812, %v806
    %v1347 = vpack.c.b16 %v813, %v807
    %v1348 = vpack.c.b16 %v814, %v808
    %v1349 = vpack.c.b16 %v815, %v809
    %v1350 = vpack.c.b16 %v816, %v810
    %v1351 = vpack.c.b16 %v823, %v817
    %v1352 = vpack.c.b16 %v824, %v818
    %v1353 = vpack.c.b16 %v825, %v819
    %v1354 = vpack.c.b16 %v826, %v820
    %v1355 = vpack.c.b16 %v827, %v821
    %v1356 = vpack.c.b16 %v828, %v822
    %v1357 = vpack.c.b16 %v835, %v829
    %v1358 = vpack.c.b16 %v836, %v830
    %v1359 = vpack.c.b16 %v837, %v831
    %v1360 = vpack.c.b16 %v838, %v832
    %v1361 = vpack.c.b16 %v839, %v833
    %v1362 = vpack.c.b16 %v840, %v834
    %v1363 = vpack.c.b16 %v847, %v841
    %v1364 = vpack.c.b16 %v848, %v842
    %v1365 = vpack.c.b16 %v849, %v843
    %v1366 = vpack.c.b16 %v850, %v844
    %v1367 = vpack.c.b16 %v851, %v845
    %v1368 = vpack.c.b16 %v852, %v846
    %v1369 = vpack.c.b16 %v859, %v853
    %v1370 = vpack.c.b16 %v860, %v854
    %v1371 = vpack.c.b16 %v861, %v855
    %v1372 = vpack.c.b16 %v862, %v856
    %v1373 = vpack.c.b16 %v863, %v857
    %v1374 = vpack.c.b16 %v864, %v858
    %v1375 = vpack.c.b16 %v871, %v865
    %v1376 = vpack.c.b16 %v872, %v866
    %v1377 = vpack.c.b16 %v873, %v867
    %v1378 = vpack.c.b16 %v874, %v868
    %v1379 = vpack.c.b16 %v875, %v869
    %v1380 = vpack.c.b16 %v876, %v870
    %v1381 = vpack.c.b16 %v883, %v877
    %v1382 = vpack.c.b16 %v884, %v878
    %v1383 = vpack.c.b16 %v885, %v879
    %v1384 = vpack.c.b16 %v886, %v880
    %v1385 = vpack.c.b16 %v887, %v881
    %v1386 = vpack.c.b16 %v888, %v882
    %v1387 = vpack.c.b16 %v895, %v889
    %v1388 = vpack.c.b16 %v896, %v890
    %v1389 = vpack.c.b16 %v897, %v891
    %v1390 = vpack.c.b16 %v898, %v892
    %v1391 = vpack.c.b16 %v899, %v893
    %v1392 = vpack.c.b16 %v900, %v894
    %v1393 = vpack.c.b16 %v907, %v901
    %v1394 = vpack.c.b16 %v908, %v902
    %v1395 = vpack.c.b16 %v909, %v903
    %v1396 = vpack.c.b16 %v910, %v904
    %v1397 = vpack.c.b16 %v911, %v905
    %v1398 = vpack.c.b16 %v912, %v906
    %v1399 = vpack.c.b16 %v919, %v913
    %v1400 = vpack.c.b16 %v920, %v914
    %v1401 = vpack.c.b16 %v921, %v915
    %v1402 = vpack.c.b16 %v922, %v916
    %v1403 = vpack.c.b16 %v923, %v917
    %v1404 = vpack.c.b16 %v924, %v918
    %v1405 = vpack.c.b16 %v931, %v925
    %v1406 = vpack.c.b16 %v932, %v926
    %v1407 = vpack.c.b16 %v933, %v927
    %v1408 = vpack.c.b16 %v934, %v928
    %v1409 = vpack.c.b16 %v935, %v929
    %v1410 = vpack.c.b16 %v936, %v930
    %v1411 = vpack.c.b16 %v943, %v937
    %v1412 = vpack.c.b16 %v944, %v938
    %v1413 = vpack.c.b16 %v945, %v939
    %v1414 = vpack.c.b16 %v946, %v940
    %v1415 = vpack.c.b16 %v947, %v941
    %v1416 = vpack.c.b16 %v948, %v942
    %v1417 = vpack.c.b16 %v955, %v949
    %v1418 = vpack.c.b16 %v956, %v950
    %v1419 = vpack.c.b16 %v957, %v951
    %v1420 = vpack.c.b16 %v958, %v952
    %v1421 = vpack.c.b16 %v959, %v953
    %v1422 = vpack.c.b16 %v960, %v954
    %v1423 = vpack.c.b16 %v967, %v961
    %v1424 = vpack.c.b16 %v968, %v962
    %v1425 = vpack.c.b16 %v969, %v963
    %v1426 = vpack.c.b16 %v970, %v964
    %v1427 = vpack.c.b16 %v971, %v965
    %v1428 = vpack.c.b16 %v972, %v966
    %v1429 = vpack.c.b16 %v979, %v973
    %v1430 = vpack.c.b16 %v980, %v974
    %v1431 = vpack.c.b16 %v981, %v975
    %v1432 = vpack.c.b16 %v982, %v976
    %v1433 = vpack.c.b16 %v983, %v977
    %v1434 = vpack.c.b16 %v984, %v978
    %v1435 = vpack.c.b16 %v991, %v985
    %v1436 = vpack.c.b16 %v992, %v986
    %v1437 = vpack.c.b16 %v993, %v987
    %v1438 = vpack.c.b16 %v994, %v988
    %v1439 = vpack.c.b16 %v995, %v989
    %v1440 = vpack.c.b16 %v996, %v990
    %v1441 = vpack.c.b16 %v1003, %v997
    %v1442 = vpack.c.b16 %v1004, %v998
    %v1443 = vpack.c.b16 %v1005, %v999
    %v1444 = vpack.c.b16 %v1006, %v1000
    %v1445 = vpack.c.b16 %v1007, %v1001
    %v1446 = vpack.c.b16 %v1008, %v1002
    %v1447 = vpack.c.b16 %v1015, %v1009
    %v1448 = vpack.c.b16 %v1016, %v1010
    %v1449 = vpack.c.b16 %v1017, %v1011
    %v1450 = vpack.c.b16 %v1018, %v1012
    %v1451 = vpack.c.b16 %v1019, %v1013
    %v1452 = vpack.c.b16 %v1020, %v1014
    %v1453 = vpack.c.b16 %v1027, %v1021
    %v1454 = vpack.c.b16 %v1028, %v1022
    %v1455 = vpack.c.b16 %v1029, %v1023
    %v1456 = vpack.c.b16 %v1030, %v1024
    %v1457 = vpack.c.b16 %v1031, %v1025
    %v1458 = vpack.c.b16 %v1032, %v1026
    %v1459 = vpack.c.b16 %v1039, %v1033
    %v1460 = vpack.c.b16 %v1040, %v1034
    %v1461 = vpack.c.b16 %v1041, %v1035
    %v1462 = vpack.c.b16 %v1042, %v1036
    %v1463 = vpack.c.b16 %v1043, %v1037
    %v1464 = vpack.c.b16 %v1044, %v1038
    %v1465 = vpack.c.b16 %v1051, %v1045
    %v1466 = vpack.c.b16 %v1052, %v1046
    %v1467 = vpack.c.b16 %v1053, %v1047
    %v1468 = vpack.c.b16 %v1054, %v1048
    %v1469 = vpack.c.b16 %v1055, %v1049
    %v1470 = vpack.c.b16 %v1056, %v1050
    %v1471 = vpack.c.b16 %v1063, %v1057
    %v1472 = vpack.c.b16 %v1064, %v1058
    %v1473 = vpack.c.b16 %v1065, %v1059
    %v1474 = vpack.c.b16 %v1066, %v1060
    %v1475 = vpack.c.b16 %v1067, %v1061
    %v1476 = vpack.c.b16 %v1068, %v1062
    %v1477 = vpack.c.b16 %v1075, %v1069
    %v1478 = vpack.c.b16 %v1076, %v1070
    %v1479 = vpack.c.b16 %v1077, %v1071
    %v1480 = vpack.c.b16 %v1078, %v1072
    %v1481 = vpack.c.b16 %v1079, %v1073
    %v1482 = vpack.c.b16 %v1080, %v1074
    %v1483 = vpack.c.b16 %v1087, %v1081
    %v1484 = vpack.c.b16 %v1088, %v1082
    %v1485 = vpack.c.b16 %v1089, %v1083
    %v1486 = vpack.c.b16 %v1090, %v1084
    %v1487 = vpack.c.b16 %v1091, %v1085
    %v1488 = vpack.c.b16 %v1092, %v1086
    %v1489 = vpack.c.b16 %v1099, %v1093
    %v1490 = vpack.c.b16 %v1100, %v1094
    %v1491 = vpack.c.b16 %v1101, %v1095
    %v1492 = vpack.c.b16 %v1102, %v1096
    %v1493 = vpack.c.b16 %v1103, %v1097
    %v1494 = vpack.c.b16 %v1104, %v1098
    %v1495 = vpack.c.b16 %v1111, %v1105
    %v1496 = vpack.c.b16 %v1112, %v1106
    %v1497 = vpack.c.b16 %v1113, %v1107
    %v1498 = vpack.c.b16 %v1114, %v1108
    %v1499 = vpack.c.b16 %v1115, %v1109
    %v1500 = vpack.c.b16 %v1116, %v1110
    %v1501 = vpack.c.b16 %v1123, %v1117
    %v1502 = vpack.c.b16 %v1124, %v1118
    %v1503 = vpack.c.b16 %v1125, %v1119
    %v1504 = vpack.c.b16 %v1126, %v1120
    %v1505 = vpack.c.b16 %v1127, %v1121
    %v1506 = vpack.c.b16 %v1128, %v1122
    %v1507 = vpack.c.b16 %v1135, %v1129
    %v1508 = vpack.c.b16 %v1136, %v1130
    %v1509 = vpack.c.b16 %v1137, %v1131
    %v1510 = vpack.c.b16 %v1138, %v1132
    %v1511 = vpack.c.b16 %v1139, %v1133
    %v1512 = vpack.c.b16 %v1140, %v1134
    %v1513 = vpack.c.b16 %v1147, %v1141
    %v1514 = vpack.c.b16 %v1148, %v1142
    %v1515 = vpack.c.b16 %v1149, %v1143
    %v1516 = vpack.c.b16 %v1150, %v1144
    %v1517 = vpack.c.b16 %v1151, %v1145
    %v1518 = vpack.c.b16 %v1152, %v1146
    %v1519 = vpack.c.b16 %v1159, %v1153
    %v1520 = vpack.c.b16 %v1160, %v1154
    %v1521 = vpack.c.b16 %v1161, %v1155
    %v1522 = vpack.c.b16 %v1162, %v1156
    %v1523 = vpack.c.b16 %v1163, %v1157
    %v1524 = vpack.c.b16 %v1164, %v1158
    %v1525 = vpack.c.b16 %v1171, %v1165
    %v1526 = vpack.c.b16 %v1172, %v1166
    %v1527 = vpack.c.b16 %v1173, %v1167
    %v1528 = vpack.c.b16 %v1174, %v1168
    %v1529 = vpack.c.b16 %v1175, %v1169
    %v1530 = vpack.c.b16 %v1176, %v1170
    %v1531 = vpack.c.b16 %v1183, %v1177
    %v1532 = vpack.c.b16 %v1184, %v1178
    %v1533 = vpack.c.b16 %v1185, %v1179
    %v1534 = vpack.c.b16 %v1186, %v1180
    %v1535 = vpack.c.b16 %v1187, %v1181
    %v1536 = vpack.c.b16 %v1188, %v1182
    %v1537 = vpack.c.b16 %v1195, %v1189
    %v1538 = vpack.c.b16 %v1196, %v1190
    %v1539 = vpack.c.b16 %v1197, %v1191
    %v1540 = vpack.c.b16 %v1198, %v1192
    %v1541 = vpack.c.b16 %v1199, %v1193
    %v1542 = vpack.c.b16 %v1200, %v1194
    %v1543 = vpack.c.b16 %v1207, %v1201
    %v1544 = vpack.c.b16 %v1208, %v1202
    %v1545 = vpack.c.b16 %v1209, %v1203
    %v1546 = vpack.c.b16 %v1210, %v1204
    %v1547 = vpack.c.b16 %v1211, %v1205
    %v1548 = vpack.c.b16 %v1212, %v1206
    %v1549 = vpack.c.b16 %v1219, %v1213
    %v1550 = vpack.c.b16 %v1220, %v1214
    %v1551 = vpack.c.b16 %v1221, %v1215
    %v1552 = vpack.c.b16 %v1222, %v1216
    %v1553 = vpack.c.b16 %v1223, %v1217
    %v1554 = vpack.c.b16 %v1224, %v1218
    %v1555 = vpack.c.b16 %v1231, %v1225
    %v1556 = vpack.c.b16 %v1232, %v1226
    %v1557 = vpack.c.b16 %v1233, %v1227
    %v1558 = vpack.c.b16 %v1234, %v1228
    %v1559 = vpack.c.b16 %v1235, %v1229
    %v1560 = vpack.c.b16 %v1236, %v1230
    %v1561 = vpack.c.b16 %v1243, %v1237
    %v1562 = vpack.c.b16 %v1244, %v1238
    %v1563 = vpack.c.b16 %v1245, %v1239
    %v1564 = vpack.c.b16 %v1246, %v1240
    %v1565 = vpack.c.b16 %v1247, %v1241
    %v1566 = vpack.c.b16 %v1248, %v1242
    %v1567 = vpack.c.b16 %v1255, %v1249
    %v1568 = vpack.c.b16 %v1256, %v1250
    %v1569 = vpack.c.b16 %v1257, %v1251
    %v1570 = vpack.c.b16 %v1258, %v1252
    %v1571 = vpack.c.b16 %v1259, %v1253
    %v1572 = vpack.c.b16 %v1260, %v1254
    %v1573 = vpack.c.b16 %v1267, %v1261
    %v1574 = vpack.c.b16 %v1268, %v1262
    %v1575 = vpack.c.b16 %v1269, %v1263
    %v1576 = vpack.c.b16 %v1270, %v1264
    %v1577 = vpack.c.b16 %v1271, %v1265
    %v1578 = vpack.c.b16 %v1272, %v1266
    %v1579 = vpack.c.b16 %v1279, %v1273
    %v1580 = vpack.c.b16 %v1280, %v1274
    %v1581 = vpack.c.b16 %v1281, %v1275
    %v1582 = vpack.c.b16 %v1282, %v1276
    %v1583 = vpack.c.b16 %v1283, %v1277
    %v1584 = vpack.c.b16 %v1284, %v1278
    %v1585 = vpack.c.b16 %v1291, %v1285
    %v1586 = vpack.c.b16 %v1292, %v1286
    %v1587 = vpack.c.b16 %v1293, %v1287
    %v1588 = vpack.c.b16 %v1294, %v1288
    %v1589 = vpack.c.b16 %v1295, %v1289
    %v1590 = vpack.c.b16 %v1296, %v1290
    %v1591 = vpack.c.b16 %v1303, %v1297
    %v1592 = vpack.c.b16 %v1304, %v1298
    %v1593 = vpack.c.b16 %v1305, %v1299
    %v1594 = vpack.c.b16 %v1306, %v1300
    %v1595 = vpack.c.b16 %v1307, %v1301
    %v1596 = vpack.c.b16 %v1308, %v1302
    %1885 = vmatprep.subr.bf16.mxu0 %v1310
    %1886 = vmatpush1.bf16.msra.mxu0 %v1309
    %1887 = vmatprep.subr.bf16.mxu0 %v1316
    %1888 = vmatpush1.bf16.msra.mxu0 %v1315
    %1889 = vmatprep.subr.bf16.mxu0 %v1322
    %1890 = vmatpush1.bf16.msra.mxu0 %v1321
    %1891 = vmatprep.subr.bf16.mxu0 %v1328
    %1892 = vmatpush1.bf16.msra.mxu0 %v1327
    %1893 = vmatprep.subr.bf16.mxu0 %v1334
    %1894 = vmatpush1.bf16.msra.mxu0 %v1333
    %1895 = vmatprep.subr.bf16.mxu0 %v1340
    %1896 = vmatpush1.bf16.msra.mxu0 %v1339
    %1897 = vmatprep.subr.bf16.mxu0 %v1346
    %1898 = vmatpush1.bf16.msra.mxu0 %v1345
    %1899 = vmatprep.subr.bf16.mxu0 %v1352
    %1900 = vmatpush1.bf16.msra.mxu0 %v1351
    %1901 = vmatprep.subr.bf16.mxu0 %v1358
    %1902 = vmatpush1.bf16.msra.mxu0 %v1357
    %1903 = vmatprep.subr.bf16.mxu0 %v1364
    %1904 = vmatpush1.bf16.msra.mxu0 %v1363
    %1905 = vmatprep.subr.bf16.mxu0 %v1370
    %1906 = vmatpush1.bf16.msra.mxu0 %v1369
    %1907 = vmatprep.subr.bf16.mxu0 %v1376
    %1908 = vmatpush1.bf16.msra.mxu0 %v1375
    %1909 = vmatprep.subr.bf16.mxu0 %v1382
    %1910 = vmatpush1.bf16.msra.mxu0 %v1381
    %1911 = vmatprep.subr.bf16.mxu0 %v1388
    %1912 = vmatpush1.bf16.msra.mxu0 %v1387
    %1913 = vmatprep.subr.bf16.mxu0 %v1394
    %1914 = vmatpush1.bf16.msra.mxu0 %v1393
    %1915 = vmatprep.subr.bf16.mxu0 %v1400
    %1916 = vmatpush1.bf16.msra.mxu0 %v1399
    %1917 = vmatprep.mubr.bf16.mxu0 %v120
    %1918 = vmatmul.mubr.bf16.gmra.mrb[0].mxu0 %v119
    %v1919 = vpop.f32.mrb[0].mxu0
    %v1920 = vadd.f32 %v418, %v1919
    %v1921 = vpop.f32.mrb[0].mxu0
    %v1922 = vadd.f32 %v422, %v1921
    %v1923 = vpop.f32.mrb[0].mxu0
    %v1924 = vpop.f32.mrb[0].mxu0
    %1925 = vdwg.mxu0
    %1926 = vmatprep.subr.bf16.mxu0 %v1406
    %1927 = vmatpush1.bf16.msra.mxu0 %v1405
    %1928 = vmatprep.subr.bf16.mxu0 %v1412
    %1929 = vmatpush1.bf16.msra.mxu0 %v1411
    %1930 = vmatprep.subr.bf16.mxu0 %v1418
    %1931 = vmatpush1.bf16.msra.mxu0 %v1417
    %1932 = vmatprep.subr.bf16.mxu0 %v1424
    %1933 = vmatpush1.bf16.msra.mxu0 %v1423
    %1934 = vmatprep.subr.bf16.mxu0 %v1430
    %1935 = vmatpush1.bf16.msra.mxu0 %v1429
    %1936 = vmatprep.subr.bf16.mxu0 %v1436
    %1937 = vmatpush1.bf16.msra.mxu0 %v1435
    %1938 = vmatprep.subr.bf16.mxu0 %v1442
    %1939 = vmatpush1.bf16.msra.mxu0 %v1441
    %1940 = vmatprep.subr.bf16.mxu0 %v1448
    %1941 = vmatpush1.bf16.msra.mxu0 %v1447
    %1942 = vmatprep.subr.bf16.mxu0 %v1454
    %1943 = vmatpush1.bf16.msra.mxu0 %v1453
    %1944 = vmatprep.subr.bf16.mxu0 %v1460
    %1945 = vmatpush1.bf16.msra.mxu0 %v1459
    %1946 = vmatprep.subr.bf16.mxu0 %v1466
    %1947 = vmatpush1.bf16.msra.mxu0 %v1465
    %1948 = vmatprep.subr.bf16.mxu0 %v1472
    %1949 = vmatpush1.bf16.msra.mxu0 %v1471
    %1950 = vmatprep.subr.bf16.mxu0 %v1478
    %1951 = vmatpush1.bf16.msra.mxu0 %v1477
    %1952 = vmatprep.subr.bf16.mxu0 %v1484
    %1953 = vmatpush1.bf16.msra.mxu0 %v1483
    %1954 = vmatprep.subr.bf16.mxu0 %v1490
    %1955 = vmatpush1.bf16.msra.mxu0 %v1489
    %1956 = vmatprep.subr.bf16.mxu0 %v1496
    %1957 = vmatpush1.bf16.msra.mxu0 %v1495
    %1958 = vmatprep.mubr.bf16.mxu0 %v122
    %1959 = vmatmul.mubr.bf16.gmra.mrb[0].mxu0 %v121
    %v1960 = vpop.f32.mrb[0].mxu0
    %v1961 = vadd.f32 %v1920, %v1960
    %v1962 = vpop.f32.mrb[0].mxu0
    %v1963 = vadd.f32 %v1922, %v1962
    %v1964 = vpop.f32.mrb[0].mxu0
    %v1965 = vpop.f32.mrb[0].mxu0
    %1966 = vdwg.mxu0
    %1967 = vmatprep.subr.bf16.mxu0 %v1502
    %1968 = vmatpush1.bf16.msra.mxu0 %v1501
    %1969 = vmatprep.subr.bf16.mxu0 %v1508
    %1970 = vmatpush1.bf16.msra.mxu0 %v1507
    %1971 = vmatprep.subr.bf16.mxu0 %v1514
    %1972 = vmatpush1.bf16.msra.mxu0 %v1513
    %1973 = vmatprep.subr.bf16.mxu0 %v1520
    %1974 = vmatpush1.bf16.msra.mxu0 %v1519
    %1975 = vmatprep.subr.bf16.mxu0 %v1526
    %1976 = vmatpush1.bf16.msra.mxu0 %v1525
    %1977 = vmatprep.subr.bf16.mxu0 %v1532
    %1978 = vmatpush1.bf16.msra.mxu0 %v1531
    %1979 = vmatprep.subr.bf16.mxu0 %v1538
    %1980 = vmatpush1.bf16.msra.mxu0 %v1537
    %1981 = vmatprep.subr.bf16.mxu0 %v1544
    %1982 = vmatpush1.bf16.msra.mxu0 %v1543
    %1983 = vmatprep.subr.bf16.mxu0 %v1550
    %1984 = vmatpush1.bf16.msra.mxu0 %v1549
    %1985 = vmatprep.subr.bf16.mxu0 %v1556
    %1986 = vmatpush1.bf16.msra.mxu0 %v1555
    %1987 = vmatprep.subr.bf16.mxu0 %v1562
    %1988 = vmatpush1.bf16.msra.mxu0 %v1561
    %1989 = vmatprep.subr.bf16.mxu0 %v1568
    %1990 = vmatpush1.bf16.msra.mxu0 %v1567
    %1991 = vmatprep.subr.bf16.mxu0 %v1574
    %1992 = vmatpush1.bf16.msra.mxu0 %v1573
    %1993 = vmatprep.subr.bf16.mxu0 %v1580
    %1994 = vmatpush1.bf16.msra.mxu0 %v1579
    %1995 = vmatprep.subr.bf16.mxu0 %v1586
    %1996 = vmatpush1.bf16.msra.mxu0 %v1585
    %1997 = vmatprep.subr.bf16.mxu0 %v1592
    %1998 = vmatpush1.bf16.msra.mxu0 %v1591
    %1999 = vmatprep.mubr.bf16.mxu0 %v124
    %2000 = vmatmul.mubr.bf16.gmra.mrb[0].mxu0 %v123
    %v2001 = vpop.f32.mrb[0].mxu0
    %v2002 = vadd.f32 %v1961, %v2001
    %v2003 = vpop.f32.mrb[0].mxu0
    %v2004 = vadd.f32 %v1963, %v2003
    %v2005 = vpop.f32.mrb[0].mxu0
    %v2006 = vpop.f32.mrb[0].mxu0
    %2007 = vdwg.mxu0
    %2008 = vmatprep.subr.bf16.mxu0 %v1312
    %2009 = vmatpush1.bf16.msra.mxu0 %v1311
    %2010 = vmatprep.subr.bf16.mxu0 %v1318
    %2011 = vmatpush1.bf16.msra.mxu0 %v1317
    %2012 = vmatprep.subr.bf16.mxu0 %v1324
    %2013 = vmatpush1.bf16.msra.mxu0 %v1323
    %2014 = vmatprep.subr.bf16.mxu0 %v1330
    %2015 = vmatpush1.bf16.msra.mxu0 %v1329
    %2016 = vmatprep.subr.bf16.mxu0 %v1336
    %2017 = vmatpush1.bf16.msra.mxu0 %v1335
    %2018 = vmatprep.subr.bf16.mxu0 %v1342
    %2019 = vmatpush1.bf16.msra.mxu0 %v1341
    %2020 = vmatprep.subr.bf16.mxu0 %v1348
    %2021 = vmatpush1.bf16.msra.mxu0 %v1347
    %2022 = vmatprep.subr.bf16.mxu0 %v1354
    %2023 = vmatpush1.bf16.msra.mxu0 %v1353
    %2024 = vmatprep.subr.bf16.mxu0 %v1360
    %2025 = vmatpush1.bf16.msra.mxu0 %v1359
    %2026 = vmatprep.subr.bf16.mxu0 %v1366
    %2027 = vmatpush1.bf16.msra.mxu0 %v1365
    %2028 = vmatprep.subr.bf16.mxu0 %v1372
    %2029 = vmatpush1.bf16.msra.mxu0 %v1371
    %2030 = vmatprep.subr.bf16.mxu0 %v1378
    %2031 = vmatpush1.bf16.msra.mxu0 %v1377
    %2032 = vmatprep.subr.bf16.mxu0 %v1384
    %2033 = vmatpush1.bf16.msra.mxu0 %v1383
    %2034 = vmatprep.subr.bf16.mxu0 %v1390
    %2035 = vmatpush1.bf16.msra.mxu0 %v1389
    %2036 = vmatprep.subr.bf16.mxu0 %v1396
    %2037 = vmatpush1.bf16.msra.mxu0 %v1395
    %2038 = vmatprep.subr.bf16.mxu0 %v1402
    %2039 = vmatpush1.bf16.msra.mxu0 %v1401
    %2040 = vmatprep.mubr.bf16.mxu0 %v120
    %2041 = vmatmul.mubr.bf16.gmra.mrb[0].mxu0 %v119
    %v2042 = vpop.f32.mrb[0].mxu0
    %v2043 = vadd.f32 %v426, %v2042
    %v2044 = vpop.f32.mrb[0].mxu0
    %v2045 = vadd.f32 %v430, %v2044
    %v2046 = vpop.f32.mrb[0].mxu0
    %v2047 = vpop.f32.mrb[0].mxu0
    %2048 = vdwg.mxu0
    %2049 = vmatprep.subr.bf16.mxu0 %v1408
    %2050 = vmatpush1.bf16.msra.mxu0 %v1407
    %2051 = vmatprep.subr.bf16.mxu0 %v1414
    %2052 = vmatpush1.bf16.msra.mxu0 %v1413
    %2053 = vmatprep.subr.bf16.mxu0 %v1420
    %2054 = vmatpush1.bf16.msra.mxu0 %v1419
    %2055 = vmatprep.subr.bf16.mxu0 %v1426
    %2056 = vmatpush1.bf16.msra.mxu0 %v1425
    %2057 = vmatprep.subr.bf16.mxu0 %v1432
    %2058 = vmatpush1.bf16.msra.mxu0 %v1431
    %2059 = vmatprep.subr.bf16.mxu0 %v1438
    %2060 = vmatpush1.bf16.msra.mxu0 %v1437
    %2061 = vmatprep.subr.bf16.mxu0 %v1444
    %2062 = vmatpush1.bf16.msra.mxu0 %v1443
    %2063 = vmatprep.subr.bf16.mxu0 %v1450
    %2064 = vmatpush1.bf16.msra.mxu0 %v1449
    %2065 = vmatprep.subr.bf16.mxu0 %v1456
    %2066 = vmatpush1.bf16.msra.mxu0 %v1455
    %2067 = vmatprep.subr.bf16.mxu0 %v1462
    %2068 = vmatpush1.bf16.msra.mxu0 %v1461
    %2069 = vmatprep.subr.bf16.mxu0 %v1468
    %2070 = vmatpush1.bf16.msra.mxu0 %v1467
    %2071 = vmatprep.subr.bf16.mxu0 %v1474
    %2072 = vmatpush1.bf16.msra.mxu0 %v1473
    %2073 = vmatprep.subr.bf16.mxu0 %v1480
    %2074 = vmatpush1.bf16.msra.mxu0 %v1479
    %2075 = vmatprep.subr.bf16.mxu0 %v1486
    %2076 = vmatpush1.bf16.msra.mxu0 %v1485
    %2077 = vmatprep.subr.bf16.mxu0 %v1492
    %2078 = vmatpush1.bf16.msra.mxu0 %v1491
    %2079 = vmatprep.subr.bf16.mxu0 %v1498
    %2080 = vmatpush1.bf16.msra.mxu0 %v1497
    %2081 = vmatprep.mubr.bf16.mxu0 %v122
    %2082 = vmatmul.mubr.bf16.gmra.mrb[0].mxu0 %v121
    %v2083 = vpop.f32.mrb[0].mxu0
    %v2084 = vadd.f32 %v2043, %v2083
    %v2085 = vpop.f32.mrb[0].mxu0
    %v2086 = vadd.f32 %v2045, %v2085
    %v2087 = vpop.f32.mrb[0].mxu0
    %v2088 = vpop.f32.mrb[0].mxu0
    %2089 = vdwg.mxu0
    %2090 = vmatprep.subr.bf16.mxu0 %v1504
    %2091 = vmatpush1.bf16.msra.mxu0 %v1503
    %2092 = vmatprep.subr.bf16.mxu0 %v1510
    %2093 = vmatpush1.bf16.msra.mxu0 %v1509
    %2094 = vmatprep.subr.bf16.mxu0 %v1516
    %2095 = vmatpush1.bf16.msra.mxu0 %v1515
    %2096 = vmatprep.subr.bf16.mxu0 %v1522
    %2097 = vmatpush1.bf16.msra.mxu0 %v1521
    %2098 = vmatprep.subr.bf16.mxu0 %v1528
    %2099 = vmatpush1.bf16.msra.mxu0 %v1527
    %2100 = vmatprep.subr.bf16.mxu0 %v1534
    %2101 = vmatpush1.bf16.msra.mxu0 %v1533
    %2102 = vmatprep.subr.bf16.mxu0 %v1540
    %2103 = vmatpush1.bf16.msra.mxu0 %v1539
    %2104 = vmatprep.subr.bf16.mxu0 %v1546
    %2105 = vmatpush1.bf16.msra.mxu0 %v1545
    %2106 = vmatprep.subr.bf16.mxu0 %v1552
    %2107 = vmatpush1.bf16.msra.mxu0 %v1551
    %2108 = vmatprep.subr.bf16.mxu0 %v1558
    %2109 = vmatpush1.bf16.msra.mxu0 %v1557
    %2110 = vmatprep.subr.bf16.mxu0 %v1564
    %2111 = vmatpush1.bf16.msra.mxu0 %v1563
    %2112 = vmatprep.subr.bf16.mxu0 %v1570
    %2113 = vmatpush1.bf16.msra.mxu0 %v1569
    %2114 = vmatprep.subr.bf16.mxu0 %v1576
    %2115 = vmatpush1.bf16.msra.mxu0 %v1575
    %2116 = vmatprep.subr.bf16.mxu0 %v1582
    %2117 = vmatpush1.bf16.msra.mxu0 %v1581
    %2118 = vmatprep.subr.bf16.mxu0 %v1588
    %2119 = vmatpush1.bf16.msra.mxu0 %v1587
    %2120 = vmatprep.subr.bf16.mxu0 %v1594
    %2121 = vmatpush1.bf16.msra.mxu0 %v1593
    %2122 = vmatprep.mubr.bf16.mxu0 %v124
    %2123 = vmatmul.mubr.bf16.gmra.mrb[0].mxu0 %v123
    %v2124 = vpop.f32.mrb[0].mxu0
    %v2125 = vadd.f32 %v2084, %v2124
    %v2126 = vpop.f32.mrb[0].mxu0
    %v2127 = vadd.f32 %v2086, %v2126
    %v2128 = vpop.f32.mrb[0].mxu0
    %v2129 = vpop.f32.mrb[0].mxu0
    %2130 = vdwg.mxu0
    %2131 = vmatprep.subr.bf16.mxu0 %v1314
    %2132 = vmatpush1.bf16.msra.mxu0 %v1313
    %2133 = vmatprep.subr.bf16.mxu0 %v1320
    %2134 = vmatpush1.bf16.msra.mxu0 %v1319
    %2135 = vmatprep.subr.bf16.mxu0 %v1326
    %2136 = vmatpush1.bf16.msra.mxu0 %v1325
    %2137 = vmatprep.subr.bf16.mxu0 %v1332
    %2138 = vmatpush1.bf16.msra.mxu0 %v1331
    %2139 = vmatprep.subr.bf16.mxu0 %v1338
    %2140 = vmatpush1.bf16.msra.mxu0 %v1337
    %2141 = vmatprep.subr.bf16.mxu0 %v1344
    %2142 = vmatpush1.bf16.msra.mxu0 %v1343
    %2143 = vmatprep.subr.bf16.mxu0 %v1350
    %2144 = vmatpush1.bf16.msra.mxu0 %v1349
    %2145 = vmatprep.subr.bf16.mxu0 %v1356
    %2146 = vmatpush1.bf16.msra.mxu0 %v1355
    %2147 = vmatprep.subr.bf16.mxu0 %v1362
    %2148 = vmatpush1.bf16.msra.mxu0 %v1361
    %2149 = vmatprep.subr.bf16.mxu0 %v1368
    %2150 = vmatpush1.bf16.msra.mxu0 %v1367
    %2151 = vmatprep.subr.bf16.mxu0 %v1374
    %2152 = vmatpush1.bf16.msra.mxu0 %v1373
    %2153 = vmatprep.subr.bf16.mxu0 %v1380
    %2154 = vmatpush1.bf16.msra.mxu0 %v1379
    %2155 = vmatprep.subr.bf16.mxu0 %v1386
    %2156 = vmatpush1.bf16.msra.mxu0 %v1385
    %2157 = vmatprep.subr.bf16.mxu0 %v1392
    %2158 = vmatpush1.bf16.msra.mxu0 %v1391
    %2159 = vmatprep.subr.bf16.mxu0 %v1398
    %2160 = vmatpush1.bf16.msra.mxu0 %v1397
    %2161 = vmatprep.subr.bf16.mxu0 %v1404
    %2162 = vmatpush1.bf16.msra.mxu0 %v1403
    %2163 = vmatprep.mubr.bf16.mxu0 %v120
    %2164 = vmatmul.mubr.bf16.gmra.mrb[0].mxu0 %v119
    %v2165 = vpop.f32.mrb[0].mxu0
    %v2166 = vadd.f32 %v434, %v2165
    %v2167 = vpop.f32.mrb[0].mxu0
    %v2168 = vadd.f32 %v438, %v2167
    %v2169 = vpop.f32.mrb[0].mxu0
    %v2170 = vpop.f32.mrb[0].mxu0
    %2171 = vdwg.mxu0
    %2172 = vmatprep.subr.bf16.mxu0 %v1410
    %2173 = vmatpush1.bf16.msra.mxu0 %v1409
    %2174 = vmatprep.subr.bf16.mxu0 %v1416
    %2175 = vmatpush1.bf16.msra.mxu0 %v1415
    %2176 = vmatprep.subr.bf16.mxu0 %v1422
    %2177 = vmatpush1.bf16.msra.mxu0 %v1421
    %2178 = vmatprep.subr.bf16.mxu0 %v1428
    %2179 = vmatpush1.bf16.msra.mxu0 %v1427
    %2180 = vmatprep.subr.bf16.mxu0 %v1434
    %2181 = vmatpush1.bf16.msra.mxu0 %v1433
    %2182 = vmatprep.subr.bf16.mxu0 %v1440
    %2183 = vmatpush1.bf16.msra.mxu0 %v1439
    %2184 = vmatprep.subr.bf16.mxu0 %v1446
    %2185 = vmatpush1.bf16.msra.mxu0 %v1445
    %2186 = vmatprep.subr.bf16.mxu0 %v1452
    %2187 = vmatpush1.bf16.msra.mxu0 %v1451
    %2188 = vmatprep.subr.bf16.mxu0 %v1458
    %2189 = vmatpush1.bf16.msra.mxu0 %v1457
    %2190 = vmatprep.subr.bf16.mxu0 %v1464
    %2191 = vmatpush1.bf16.msra.mxu0 %v1463
    %2192 = vmatprep.subr.bf16.mxu0 %v1470
    %2193 = vmatpush1.bf16.msra.mxu0 %v1469
    %2194 = vmatprep.subr.bf16.mxu0 %v1476
    %2195 = vmatpush1.bf16.msra.mxu0 %v1475
    %2196 = vmatprep.subr.bf16.mxu0 %v1482
    %2197 = vmatpush1.bf16.msra.mxu0 %v1481
    %2198 = vmatprep.subr.bf16.mxu0 %v1488
    %2199 = vmatpush1.bf16.msra.mxu0 %v1487
    %2200 = vmatprep.subr.bf16.mxu0 %v1494
    %2201 = vmatpush1.bf16.msra.mxu0 %v1493
    %2202 = vmatprep.subr.bf16.mxu0 %v1500
    %2203 = vmatpush1.bf16.msra.mxu0 %v1499
    %2204 = vmatprep.mubr.bf16.mxu0 %v122
    %2205 = vmatmul.mubr.bf16.gmra.mrb[0].mxu0 %v121
    %v2206 = vpop.f32.mrb[0].mxu0
    %v2207 = vadd.f32 %v2166, %v2206
    %v2208 = vpop.f32.mrb[0].mxu0
    %v2209 = vadd.f32 %v2168, %v2208
    %v2210 = vpop.f32.mrb[0].mxu0
    %v2211 = vpop.f32.mrb[0].mxu0
    %2212 = vdwg.mxu0
    %2213 = vmatprep.subr.bf16.mxu0 %v1506
    %2214 = vmatpush1.bf16.msra.mxu0 %v1505
    %2215 = vmatprep.subr.bf16.mxu0 %v1512
    %2216 = vmatpush1.bf16.msra.mxu0 %v1511
    %2217 = vmatprep.subr.bf16.mxu0 %v1518
    %2218 = vmatpush1.bf16.msra.mxu0 %v1517
    %2219 = vmatprep.subr.bf16.mxu0 %v1524
    %2220 = vmatpush1.bf16.msra.mxu0 %v1523
    %2221 = vmatprep.subr.bf16.mxu0 %v1530
    %2222 = vmatpush1.bf16.msra.mxu0 %v1529
    %2223 = vmatprep.subr.bf16.mxu0 %v1536
    %2224 = vmatpush1.bf16.msra.mxu0 %v1535
    %2225 = vmatprep.subr.bf16.mxu0 %v1542
    %2226 = vmatpush1.bf16.msra.mxu0 %v1541
    %2227 = vmatprep.subr.bf16.mxu0 %v1548
    %2228 = vmatpush1.bf16.msra.mxu0 %v1547
    %2229 = vmatprep.subr.bf16.mxu0 %v1554
    %2230 = vmatpush1.bf16.msra.mxu0 %v1553
    %2231 = vmatprep.subr.bf16.mxu0 %v1560
    %2232 = vmatpush1.bf16.msra.mxu0 %v1559
    %2233 = vmatprep.subr.bf16.mxu0 %v1566
    %2234 = vmatpush1.bf16.msra.mxu0 %v1565
    %2235 = vmatprep.subr.bf16.mxu0 %v1572
    %2236 = vmatpush1.bf16.msra.mxu0 %v1571
    %2237 = vmatprep.subr.bf16.mxu0 %v1578
    %2238 = vmatpush1.bf16.msra.mxu0 %v1577
    %2239 = vmatprep.subr.bf16.mxu0 %v1584
    %2240 = vmatpush1.bf16.msra.mxu0 %v1583
    %2241 = vmatprep.subr.bf16.mxu0 %v1590
    %2242 = vmatpush1.bf16.msra.mxu0 %v1589
    %2243 = vmatprep.subr.bf16.mxu0 %v1596
    %2244 = vmatpush1.bf16.msra.mxu0 %v1595
    %2245 = vmatprep.mubr.bf16.mxu0 %v124
    %2246 = vmatmul.mubr.bf16.gmra.mrb[0].mxu0 %v123
    %v2247 = vpop.f32.mrb[0].mxu0
    %v2248 = vadd.f32 %v2207, %v2247
    %v2249 = vpop.f32.mrb[0].mxu0
    %v2250 = vadd.f32 %v2209, %v2249
    %v2251 = vpop.f32.mrb[0].mxu0
    %v2252 = vpop.f32.mrb[0].mxu0
    %2253 = vdwg.mxu0
    %v2254 = vtanh.pop %v2002
    %v2255 = vtanh.pop %v2004
    %v2256 = vtanh.pop %v2125
    %v2257 = vtanh.pop %v2127
    %v2258 = vtanh.pop %v2248
    %v2259 = vtanh.pop %v2250
    %v2260 = vpack.c.bf16 %v2254, %v2254
    %v2261 = vpack.c.bf16 %v2255, %v2255
    %v2262 = vpack.c.bf16 %v2256, %v2256
    %v2263 = vpack.c.bf16 %v2257, %v2257
    %v2264 = vpack.c.bf16 %v2258, %v2258
    %v2265 = vpack.c.bf16 %v2259, %v2259
    %v2266 = vld [vmem:[#allocation8] sm:$0xf]
    %v2267 = vld [vmem:[#allocation8 + $0x4] sm:$0xf]
    %v2268 = vld [vmem:[#allocation8 + $0x8] sm:$0xf]
    %v2269 = vld [vmem:[#allocation8 + $0xc] sm:$0xf]
    %v2270 = vld [vmem:[#allocation8 + $0x10] sm:$0xf]
    %v2271 = vld [vmem:[#allocation8 + $0x14] sm:$0xf]
    %v2272 = vld [vmem:[#allocation8 + $0x18] sm:$0xf]
    %v2273 = vld [vmem:[#allocation8 + $0x1c] sm:$0xf]
    %v2274 = vld [vmem:[#allocation8 + $0x20] sm:$0xf]
    %v2275 = vld [vmem:[#allocation8 + $0x24] sm:$0xf]
    %v2276 = vld [vmem:[#allocation8 + $0x28] sm:$0xf]
    %v2277 = vld [vmem:[#allocation8 + $0x2c] sm:$0xf]
    %v2278 = vld [vmem:[#allocation8 + $0x30] sm:$0xf]
    %v2279 = vld [vmem:[#allocation8 + $0x34] sm:$0xf]
    %v2280 = vld [vmem:[#allocation8 + $0x38] sm:$0xf]
    %v2281 = vld [vmem:[#allocation8 + $0x3c] sm:$0xf]
    %v2282 = vld [vmem:[#allocation8 + $0x40] sm:$0xf]
    %v2283 = vld [vmem:[#allocation8 + $0x44] sm:$0xf]
    %v2284 = vld [vmem:[#allocation8 + $0x48] sm:$0xf]
    %v2285 = vld [vmem:[#allocation8 + $0x4c] sm:$0xf]
    %v2286 = vld [vmem:[#allocation8 + $0x50] sm:$0xf]
    %v2287 = vld [vmem:[#allocation8 + $0x54] sm:$0xf]
    %v2288 = vld [vmem:[#allocation8 + $0x58] sm:$0xf]
    %v2289 = vld [vmem:[#allocation8 + $0x5c] sm:$0xf]
    %v2290 = vld [vmem:[#allocation8 + $0x60] sm:$0xf]
    %v2291 = vld [vmem:[#allocation8 + $0x64] sm:$0xf]
    %v2292 = vld [vmem:[#allocation8 + $0x68] sm:$0xf]
    %v2293 = vld [vmem:[#allocation8 + $0x6c] sm:$0xf]
    %v2294 = vld [vmem:[#allocation8 + $0x70] sm:$0xf]
    %v2295 = vld [vmem:[#allocation8 + $0x74] sm:$0xf]
    %v2296 = vld [vmem:[#allocation8 + $0x78] sm:$0xf]
    %v2297 = vld [vmem:[#allocation8 + $0x7c] sm:$0xf]
    %v2298 = vld [vmem:[#allocation8 + $0x80] sm:$0xf]
    %v2299 = vld [vmem:[#allocation8 + $0x84] sm:$0xf]
    %v2300 = vld [vmem:[#allocation8 + $0x88] sm:$0xf]
    %v2301 = vld [vmem:[#allocation8 + $0x8c] sm:$0xf]
    %v2302 = vld [vmem:[#allocation8 + $0x90] sm:$0xf]
    %v2303 = vld [vmem:[#allocation8 + $0x94] sm:$0xf]
    %v2304 = vld [vmem:[#allocation8 + $0x98] sm:$0xf]
    %v2305 = vld [vmem:[#allocation8 + $0x9c] sm:$0xf]
    %v2306 = vld [vmem:[#allocation8 + $0xa0] sm:$0xf]
    %v2307 = vld [vmem:[#allocation8 + $0xa4] sm:$0xf]
    %v2308 = vld [vmem:[#allocation8 + $0xa8] sm:$0xf]
    %v2309 = vld [vmem:[#allocation8 + $0xac] sm:$0xf]
    %v2310 = vld [vmem:[#allocation8 + $0xb0] sm:$0xf]
    %v2311 = vld [vmem:[#allocation8 + $0xb4] sm:$0xf]
    %v2312 = vld [vmem:[#allocation8 + $0xb8] sm:$0xf]
    %v2313 = vld [vmem:[#allocation8 + $0xbc] sm:$0xf]
    %v2314 = vld [vmem:[#allocation8 + $0xc0] sm:$0xf]
    %v2315 = vld [vmem:[#allocation8 + $0xc4] sm:$0xf]
    %v2316 = vld [vmem:[#allocation8 + $0xc8] sm:$0xf]
    %v2317 = vld [vmem:[#allocation8 + $0xcc] sm:$0xf]
    %v2318 = vld [vmem:[#allocation8 + $0xd0] sm:$0xf]
    %v2319 = vld [vmem:[#allocation8 + $0xd4] sm:$0xf]
    %v2320 = vld [vmem:[#allocation8 + $0xd8] sm:$0xf]
    %v2321 = vld [vmem:[#allocation8 + $0xdc] sm:$0xf]
    %v2322 = vld [vmem:[#allocation8 + $0xe0] sm:$0xf]
    %v2323 = vld [vmem:[#allocation8 + $0xe4] sm:$0xf]
    %v2324 = vld [vmem:[#allocation8 + $0xe8] sm:$0xf]
    %v2325 = vld [vmem:[#allocation8 + $0xec] sm:$0xf]
    %v2326 = vld [vmem:[#allocation8 + $0xf0] sm:$0xf]
    %v2327 = vld [vmem:[#allocation8 + $0xf4] sm:$0xf]
    %v2328 = vld [vmem:[#allocation8 + $0xf8] sm:$0xf]
    %v2329 = vld [vmem:[#allocation8 + $0xfc] sm:$0xf]
    %v2330 = vld [vmem:[#allocation8 + $0x100] sm:$0xf]
    %v2331 = vld [vmem:[#allocation8 + $0x104] sm:$0xf]
    %v2332 = vld [vmem:[#allocation8 + $0x108] sm:$0xf]
    %v2333 = vld [vmem:[#allocation8 + $0x10c] sm:$0xf]
    %v2334 = vld [vmem:[#allocation8 + $0x110] sm:$0xf]
    %v2335 = vld [vmem:[#allocation8 + $0x114] sm:$0xf]
    %v2336 = vld [vmem:[#allocation8 + $0x118] sm:$0xf]
    %v2337 = vld [vmem:[#allocation8 + $0x11c] sm:$0xf]
    %v2338 = vld [vmem:[#allocation8 + $0x120] sm:$0xf]
    %v2339 = vld [vmem:[#allocation8 + $0x124] sm:$0xf]
    %v2340 = vld [vmem:[#allocation8 + $0x128] sm:$0xf]
    %v2341 = vld [vmem:[#allocation8 + $0x12c] sm:$0xf]
    %v2342 = vld [vmem:[#allocation8 + $0x130] sm:$0xf]
    %v2343 = vld [vmem:[#allocation8 + $0x134] sm:$0xf]
    %v2344 = vld [vmem:[#allocation8 + $0x138] sm:$0xf]
    %v2345 = vld [vmem:[#allocation8 + $0x13c] sm:$0xf]
    %v2346 = vld [vmem:[#allocation8 + $0x140] sm:$0xf]
    %v2347 = vld [vmem:[#allocation8 + $0x144] sm:$0xf]
    %v2348 = vld [vmem:[#allocation8 + $0x148] sm:$0xf]
    %v2349 = vld [vmem:[#allocation8 + $0x14c] sm:$0xf]
    %v2350 = vld [vmem:[#allocation8 + $0x150] sm:$0xf]
    %v2351 = vld [vmem:[#allocation8 + $0x154] sm:$0xf]
    %v2352 = vld [vmem:[#allocation8 + $0x158] sm:$0xf]
    %v2353 = vld [vmem:[#allocation8 + $0x15c] sm:$0xf]
    %v2354 = vld [vmem:[#allocation8 + $0x160] sm:$0xf]
    %v2355 = vld [vmem:[#allocation8 + $0x164] sm:$0xf]
    %v2356 = vld [vmem:[#allocation8 + $0x168] sm:$0xf]
    %v2357 = vld [vmem:[#allocation8 + $0x16c] sm:$0xf]
    %v2358 = vld [vmem:[#allocation8 + $0x170] sm:$0xf]
    %v2359 = vld [vmem:[#allocation8 + $0x174] sm:$0xf]
    %v2360 = vld [vmem:[#allocation8 + $0x178] sm:$0xf]
    %v2361 = vld [vmem:[#allocation8 + $0x17c] sm:$0xf]
    %v2362 = vld [vmem:[#allocation10] sm:$0x1]
    %v2364 = vlaneseq
    %v2365 = vshrl.u32 %v2364, 7
    %v2366 = vsub.s32 0, %v2365
    %v2367 = vrot.slane %v2362, %v2366
    %v2465 = vunpack.c.l.b16 %v2266
    %v2466 = vunpack.c.l.b16 %v2267
    %v2467 = vunpack.c.l.b16 %v2268
    %v2468 = vunpack.c.l.b16 %v2269
    %v2469 = vunpack.c.l.b16 %v2270
    %v2470 = vunpack.c.l.b16 %v2271
    %v2471 = vunpack.c.l.b16 %v2272
    %v2472 = vunpack.c.l.b16 %v2273
    %v2473 = vunpack.c.l.b16 %v2274
    %v2474 = vunpack.c.l.b16 %v2275
    %v2475 = vunpack.c.l.b16 %v2276
    %v2476 = vunpack.c.l.b16 %v2277
    %v2477 = vunpack.c.l.b16 %v2278
    %v2478 = vunpack.c.l.b16 %v2279
    %v2479 = vunpack.c.l.b16 %v2280
    %v2480 = vunpack.c.l.b16 %v2281
    %v2481 = vunpack.c.l.b16 %v2282
    %v2482 = vunpack.c.l.b16 %v2283
    %v2483 = vunpack.c.l.b16 %v2284
    %v2484 = vunpack.c.l.b16 %v2285
    %v2485 = vunpack.c.l.b16 %v2286
    %v2486 = vunpack.c.l.b16 %v2287
    %v2487 = vunpack.c.l.b16 %v2288
    %v2488 = vunpack.c.l.b16 %v2289
    %v2489 = vunpack.c.l.b16 %v2290
    %v2490 = vunpack.c.l.b16 %v2291
    %v2491 = vunpack.c.l.b16 %v2292
    %v2492 = vunpack.c.l.b16 %v2293
    %v2493 = vunpack.c.l.b16 %v2294
    %v2494 = vunpack.c.l.b16 %v2295
    %v2495 = vunpack.c.l.b16 %v2296
    %v2496 = vunpack.c.l.b16 %v2297
    %v2497 = vunpack.c.l.b16 %v2298
    %v2498 = vunpack.c.l.b16 %v2299
    %v2499 = vunpack.c.l.b16 %v2300
    %v2500 = vunpack.c.l.b16 %v2301
    %v2501 = vunpack.c.l.b16 %v2302
    %v2502 = vunpack.c.l.b16 %v2303
    %v2503 = vunpack.c.l.b16 %v2304
    %v2504 = vunpack.c.l.b16 %v2305
    %v2505 = vunpack.c.l.b16 %v2306
    %v2506 = vunpack.c.l.b16 %v2307
    %v2507 = vunpack.c.l.b16 %v2308
    %v2508 = vunpack.c.l.b16 %v2309
    %v2509 = vunpack.c.l.b16 %v2310
    %v2510 = vunpack.c.l.b16 %v2311
    %v2511 = vunpack.c.l.b16 %v2312
    %v2512 = vunpack.c.l.b16 %v2313
    %v2513 = vunpack.c.l.b16 %v2314
    %v2514 = vunpack.c.l.b16 %v2315
    %v2515 = vunpack.c.l.b16 %v2316
    %v2516 = vunpack.c.l.b16 %v2317
    %v2517 = vunpack.c.l.b16 %v2318
    %v2518 = vunpack.c.l.b16 %v2319
    %v2519 = vunpack.c.l.b16 %v2320
    %v2520 = vunpack.c.l.b16 %v2321
    %v2521 = vunpack.c.l.b16 %v2322
    %v2522 = vunpack.c.l.b16 %v2323
    %v2523 = vunpack.c.l.b16 %v2324
    %v2524 = vunpack.c.l.b16 %v2325
    %v2525 = vunpack.c.l.b16 %v2326
    %v2526 = vunpack.c.l.b16 %v2327
    %v2527 = vunpack.c.l.b16 %v2328
    %v2528 = vunpack.c.l.b16 %v2329
    %v2529 = vunpack.c.l.b16 %v2330
    %v2530 = vunpack.c.l.b16 %v2331
    %v2531 = vunpack.c.l.b16 %v2332
    %v2532 = vunpack.c.l.b16 %v2333
    %v2533 = vunpack.c.l.b16 %v2334
    %v2534 = vunpack.c.l.b16 %v2335
    %v2535 = vunpack.c.l.b16 %v2336
    %v2536 = vunpack.c.l.b16 %v2337
    %v2537 = vunpack.c.l.b16 %v2338
    %v2538 = vunpack.c.l.b16 %v2339
    %v2539 = vunpack.c.l.b16 %v2340
    %v2540 = vunpack.c.l.b16 %v2341
    %v2541 = vunpack.c.l.b16 %v2342
    %v2542 = vunpack.c.l.b16 %v2343
    %v2543 = vunpack.c.l.b16 %v2344
    %v2544 = vunpack.c.l.b16 %v2345
    %v2545 = vunpack.c.l.b16 %v2346
    %v2546 = vunpack.c.l.b16 %v2347
    %v2547 = vunpack.c.l.b16 %v2348
    %v2548 = vunpack.c.l.b16 %v2349
    %v2549 = vunpack.c.l.b16 %v2350
    %v2550 = vunpack.c.l.b16 %v2351
    %v2551 = vunpack.c.l.b16 %v2352
    %v2552 = vunpack.c.l.b16 %v2353
    %v2553 = vunpack.c.l.b16 %v2354
    %v2554 = vunpack.c.l.b16 %v2355
    %v2555 = vunpack.c.l.b16 %v2356
    %v2556 = vunpack.c.l.b16 %v2357
    %v2557 = vunpack.c.l.b16 %v2358
    %v2558 = vunpack.c.l.b16 %v2359
    %v2559 = vunpack.c.l.b16 %v2360
    %v2560 = vunpack.c.l.b16 %v2361
    %v2561 = vpack.c.b16 %v2466, %v2465
    %v2562 = vpack.c.b16 %v2468, %v2467
    %v2563 = vpack.c.b16 %v2470, %v2469
    %v2564 = vpack.c.b16 %v2472, %v2471
    %v2565 = vpack.c.b16 %v2474, %v2473
    %v2566 = vpack.c.b16 %v2476, %v2475
    %v2567 = vpack.c.b16 %v2478, %v2477
    %v2568 = vpack.c.b16 %v2480, %v2479
    %v2569 = vpack.c.b16 %v2482, %v2481
    %v2570 = vpack.c.b16 %v2484, %v2483
    %v2571 = vpack.c.b16 %v2486, %v2485
    %v2572 = vpack.c.b16 %v2488, %v2487
    %v2573 = vpack.c.b16 %v2490, %v2489
    %v2574 = vpack.c.b16 %v2492, %v2491
    %v2575 = vpack.c.b16 %v2494, %v2493
    %v2576 = vpack.c.b16 %v2496, %v2495
    %v2577 = vpack.c.b16 %v2498, %v2497
    %v2578 = vpack.c.b16 %v2500, %v2499
    %v2579 = vpack.c.b16 %v2502, %v2501
    %v2580 = vpack.c.b16 %v2504, %v2503
    %v2581 = vpack.c.b16 %v2506, %v2505
    %v2582 = vpack.c.b16 %v2508, %v2507
    %v2583 = vpack.c.b16 %v2510, %v2509
    %v2584 = vpack.c.b16 %v2512, %v2511
    %v2585 = vpack.c.b16 %v2514, %v2513
    %v2586 = vpack.c.b16 %v2516, %v2515
    %v2587 = vpack.c.b16 %v2518, %v2517
    %v2588 = vpack.c.b16 %v2520, %v2519
    %v2589 = vpack.c.b16 %v2522, %v2521
    %v2590 = vpack.c.b16 %v2524, %v2523
    %v2591 = vpack.c.b16 %v2526, %v2525
    %v2592 = vpack.c.b16 %v2528, %v2527
    %v2593 = vpack.c.b16 %v2530, %v2529
    %v2594 = vpack.c.b16 %v2532, %v2531
    %v2595 = vpack.c.b16 %v2534, %v2533
    %v2596 = vpack.c.b16 %v2536, %v2535
    %v2597 = vpack.c.b16 %v2538, %v2537
    %v2598 = vpack.c.b16 %v2540, %v2539
    %v2599 = vpack.c.b16 %v2542, %v2541
    %v2600 = vpack.c.b16 %v2544, %v2543
    %v2601 = vpack.c.b16 %v2546, %v2545
    %v2602 = vpack.c.b16 %v2548, %v2547
    %v2603 = vpack.c.b16 %v2550, %v2549
    %v2604 = vpack.c.b16 %v2552, %v2551
    %v2605 = vpack.c.b16 %v2554, %v2553
    %v2606 = vpack.c.b16 %v2556, %v2555
    %v2607 = vpack.c.b16 %v2558, %v2557
    %v2608 = vpack.c.b16 %v2560, %v2559
    %2657 = vmatprep.subr.bf16.mxu0 0
    %2658 = vmatpush1.bf16.msra.mxu0 %v2561
    %2659 = vmatprep.subr.bf16.mxu0 0
    %2660 = vmatpush1.bf16.msra.mxu0 %v2562
    %2661 = vmatprep.subr.bf16.mxu0 0
    %2662 = vmatpush1.bf16.msra.mxu0 %v2563
    %2663 = vmatprep.subr.bf16.mxu0 0
    %2664 = vmatpush1.bf16.msra.mxu0 %v2564
    %2665 = vmatprep.subr.bf16.mxu0 0
    %2666 = vmatpush1.bf16.msra.mxu0 %v2565
    %2667 = vmatprep.subr.bf16.mxu0 0
    %2668 = vmatpush1.bf16.msra.mxu0 %v2566
    %2669 = vmatprep.subr.bf16.mxu0 0
    %2670 = vmatpush1.bf16.msra.mxu0 %v2567
    %2671 = vmatprep.subr.bf16.mxu0 0
    %2672 = vmatpush1.bf16.msra.mxu0 %v2568
    %2673 = vmatprep.subr.bf16.mxu0 0
    %2674 = vmatpush1.bf16.msra.mxu0 %v2569
    %2675 = vmatprep.subr.bf16.mxu0 0
    %2676 = vmatpush1.bf16.msra.mxu0 %v2570
    %2677 = vmatprep.subr.bf16.mxu0 0
    %2678 = vmatpush1.bf16.msra.mxu0 %v2571
    %2679 = vmatprep.subr.bf16.mxu0 0
    %2680 = vmatpush1.bf16.msra.mxu0 %v2572
    %2681 = vmatprep.subr.bf16.mxu0 0
    %2682 = vmatpush1.bf16.msra.mxu0 %v2573
    %2683 = vmatprep.subr.bf16.mxu0 0
    %2684 = vmatpush1.bf16.msra.mxu0 %v2574
    %2685 = vmatprep.subr.bf16.mxu0 0
    %2686 = vmatpush1.bf16.msra.mxu0 %v2575
    %2687 = vmatprep.subr.bf16.mxu0 0
    %2688 = vmatpush1.bf16.msra.mxu0 %v2576
    %2689 = vmatprep.mubr.bf16.mxu0 %v2261
    %2690 = vmatmul.mubr.bf16.gmra.mrb[0].mxu0 %v2260
    %v2691 = vpop.f32.mrb[0].mxu0
    %v2692 = vadd.f32 %v2367, %v2691
    %v2693 = vpop.f32.mrb[0].mxu0
    %v2694 = vpop.f32.mrb[0].mxu0
    %v2695 = vpop.f32.mrb[0].mxu0
    %2696 = vdwg.mxu0
    %2697 = vmatprep.subr.bf16.mxu0 0
    %2698 = vmatpush1.bf16.msra.mxu0 %v2577
    %2699 = vmatprep.subr.bf16.mxu0 0
    %2700 = vmatpush1.bf16.msra.mxu0 %v2578
    %2701 = vmatprep.subr.bf16.mxu0 0
    %2702 = vmatpush1.bf16.msra.mxu0 %v2579
    %2703 = vmatprep.subr.bf16.mxu0 0
    %2704 = vmatpush1.bf16.msra.mxu0 %v2580
    %2705 = vmatprep.subr.bf16.mxu0 0
    %2706 = vmatpush1.bf16.msra.mxu0 %v2581
    %2707 = vmatprep.subr.bf16.mxu0 0
    %2708 = vmatpush1.bf16.msra.mxu0 %v2582
    %2709 = vmatprep.subr.bf16.mxu0 0
    %2710 = vmatpush1.bf16.msra.mxu0 %v2583
    %2711 = vmatprep.subr.bf16.mxu0 0
    %2712 = vmatpush1.bf16.msra.mxu0 %v2584
    %2713 = vmatprep.subr.bf16.mxu0 0
    %2714 = vmatpush1.bf16.msra.mxu0 %v2585
    %2715 = vmatprep.subr.bf16.mxu0 0
    %2716 = vmatpush1.bf16.msra.mxu0 %v2586
    %2717 = vmatprep.subr.bf16.mxu0 0
    %2718 = vmatpush1.bf16.msra.mxu0 %v2587
    %2719 = vmatprep.subr.bf16.mxu0 0
    %2720 = vmatpush1.bf16.msra.mxu0 %v2588
    %2721 = vmatprep.subr.bf16.mxu0 0
    %2722 = vmatpush1.bf16.msra.mxu0 %v2589
    %2723 = vmatprep.subr.bf16.mxu0 0
    %2724 = vmatpush1.bf16.msra.mxu0 %v2590
    %2725 = vmatprep.subr.bf16.mxu0 0
    %2726 = vmatpush1.bf16.msra.mxu0 %v2591
    %2727 = vmatprep.subr.bf16.mxu0 0
    %2728 = vmatpush1.bf16.msra.mxu0 %v2592
    %2729 = vmatprep.mubr.bf16.mxu0 %v2263
    %2730 = vmatmul.mubr.bf16.gmra.mrb[0].mxu0 %v2262
    %v2731 = vpop.f32.mrb[0].mxu0
    %v2732 = vadd.f32 %v2692, %v2731
    %v2733 = vpop.f32.mrb[0].mxu0
    %v2734 = vpop.f32.mrb[0].mxu0
    %v2735 = vpop.f32.mrb[0].mxu0
    %2736 = vdwg.mxu0
    %2737 = vmatprep.subr.bf16.mxu0 0
    %2738 = vmatpush1.bf16.msra.mxu0 %v2593
    %2739 = vmatprep.subr.bf16.mxu0 0
    %2740 = vmatpush1.bf16.msra.mxu0 %v2594
    %2741 = vmatprep.subr.bf16.mxu0 0
    %2742 = vmatpush1.bf16.msra.mxu0 %v2595
    %2743 = vmatprep.subr.bf16.mxu0 0
    %2744 = vmatpush1.bf16.msra.mxu0 %v2596
    %2745 = vmatprep.subr.bf16.mxu0 0
    %2746 = vmatpush1.bf16.msra.mxu0 %v2597
    %2747 = vmatprep.subr.bf16.mxu0 0
    %2748 = vmatpush1.bf16.msra.mxu0 %v2598
    %2749 = vmatprep.subr.bf16.mxu0 0
    %2750 = vmatpush1.bf16.msra.mxu0 %v2599
    %2751 = vmatprep.subr.bf16.mxu0 0
    %2752 = vmatpush1.bf16.msra.mxu0 %v2600
    %2753 = vmatprep.subr.bf16.mxu0 0
    %2754 = vmatpush1.bf16.msra.mxu0 %v2601
    %2755 = vmatprep.subr.bf16.mxu0 0
    %2756 = vmatpush1.bf16.msra.mxu0 %v2602
    %2757 = vmatprep.subr.bf16.mxu0 0
    %2758 = vmatpush1.bf16.msra.mxu0 %v2603
    %2759 = vmatprep.subr.bf16.mxu0 0
    %2760 = vmatpush1.bf16.msra.mxu0 %v2604
    %2761 = vmatprep.subr.bf16.mxu0 0
    %2762 = vmatpush1.bf16.msra.mxu0 %v2605
    %2763 = vmatprep.subr.bf16.mxu0 0
    %2764 = vmatpush1.bf16.msra.mxu0 %v2606
    %2765 = vmatprep.subr.bf16.mxu0 0
    %2766 = vmatpush1.bf16.msra.mxu0 %v2607
    %2767 = vmatprep.subr.bf16.mxu0 0
    %2768 = vmatpush1.bf16.msra.mxu0 %v2608
    %2769 = vmatprep.mubr.bf16.mxu0 %v2265
    %2770 = vmatmul.mubr.bf16.gmra.mrb[0].mxu0 %v2264
    %v2771 = vpop.f32.mrb[0].mxu0
    %v2772 = vadd.f32 %v2732, %v2771
    %v2773 = vpop.f32.mrb[0].mxu0
    %v2774 = vpop.f32.mrb[0].mxu0
    %v2775 = vpop.f32.mrb[0].mxu0
    %2776 = vdwg.mxu0
    %2777 = vst [vmem:[#allocation11] sm:$0x3] %v2772
    // Predicated region
    $region42: #{tpu_custom_call.1} parent=1 // pred_check
      _
    $region43: #{tpu_custom_call.1} parent=1 // pred_check_branch
      %2779 = sbr.rel (0) target = $region45
    $region44: #{tpu_custom_call.1} parent=1 // pred_region
      %s2781 = ssub.s32 32, 32
      %2782 = vsyncadd [#allocation4], %s2781
      %s2784 = sshll.u32 [#allocation11], 4
      %s2785 = int_to_ptr.vmem [resolvable:$true] %s2784
      %2787 = dma.vmem_to_hbm [thread:$0]  %s2785, 32, %s5, [#allocation4]
    $region45: #{tpu_custom_call.1} parent=1 // pred_fallthru
      _
    // Predicated region
    $region46: #{tpu_custom_call.1} parent=1 // pred_check
      _
    $region47: #{tpu_custom_call.1} parent=1 // pred_check_branch
      %2789 = sbr.rel (0) target = $region49
    $region48: #{tpu_custom_call.1} parent=1 // pred_region
      %2790 = dma.done [#allocation4], 32
    $region49: #{tpu_custom_call.1} parent=1 // pred_fallthru
      _
    %2791 = vsyncpa [#allocation3], 1
    %2792 = vsyncpa [#allocation6], 1
    %2793 = vsyncpa [#allocation9], 1
    %2794 = vsyncpa [#allocation4], 1

</llo_original>
